<compile_context>
chip_gen: v7x
topology: tpu7x:2x2x1
jax: 0.10.0
libtpu: 0.0.40
codegen_flags: <defaults>
</compile_context>

<pallas_src>
import jax
import jax.numpy as jnp
from jax.experimental import pallas as pl
from jax.experimental.pallas import tpu as pltpu

_BN_EPS = 1e-5
_PAD = 128          # every feature dim is zero-padded to this lane width


# ------------------------------ fused kernel --------------------------------

def _make_fused_kernel(n_hidden):
    """Fused forward kernel. Packed layer order in the weight/vector slabs:

      [0 .. n_hidden)              encoder hidden (Linear->BN->ReLU, block-diag over views)
      n_hidden                     encoder final  (Linear, block-diag)  -> concat embeddings
      n_hidden + 1                 fusion         (Linear->BN->ReLU)
      n_hidden + 2                 projection 1   (Linear->BN->ReLU)
      n_hidden + 3                 projection 2   (Linear)
      [n_hidden+4 .. 2n_hidden+4)  decoder hidden (Linear->BN->ReLU, block-diag)
      2*n_hidden + 4               decoder final  (Linear, block-diag)
    """
    l_enc_final = n_hidden
    l_fusion = n_hidden + 1
    l_proj1 = n_hidden + 2
    l_proj2 = n_hidden + 3
    l_dec0 = n_hidden + 4
    l_dec_final = 2 * n_hidden + 4

    def kernel(x_ref, m_ref, w_ref, v_ref, o_ref):
        def matmul(h, l):
            return jnp.dot(h, w_ref[l], preferred_element_type=jnp.float32)

        def bn_relu(h, l):
            # Linear (bias dropped: exact cancellation under batch-stat BN),
            # BN with single-pass variance, scale folded with gamma, then ReLU.
            y = matmul(h, l)
            vl = v_ref[l]                      # (2, PAD): row0=gamma, row1=beta
            mean = jnp.mean(y, axis=0, keepdims=True)
            var = jnp.mean(y * y, axis=0, keepdims=True) - mean * mean
            scale = jax.lax.rsqrt(var + _BN_EPS) * vl[0:1, :]
            return jnp.maximum((y - mean) * scale + vl[1:2, :], 0.0)

        def linear(h, l):
            return matmul(h, l) + v_ref[l][0:1, :]     # row0 = bias

        # masked views -------------------------------------------------------
        xm = x_ref[...] * m_ref[...]
        o_ref[:, 0 * _PAD:1 * _PAD] = xm

        # encoders (all views at once via block-diagonal weights) -------------
        h = xm
        for l in range(n_hidden):
            h = bn_relu(h, l)          # TODO(synk): Dropout treated as identity
        emb = linear(h, l_enc_final)   # == concat(view_embeddings)
        o_ref[:, 1 * _PAD:2 * _PAD] = emb

        # fusion + projection head --------------------------------------------
        fused = bn_relu(emb, l_fusion)
        o_ref[:, 2 * _PAD:3 * _PAD] = fused
        proj = linear(bn_relu(fused, l_proj1), l_proj2)
        o_ref[:, 3 * _PAD:4 * _PAD] = proj

        # decoders (block-diagonal over views) ---------------------------------
        d = emb
        for l in range(l_dec0, l_dec_final):
            d = bn_relu(d, l)
        recon = linear(d, l_dec_final)
        o_ref[:, 4 * _PAD:5 * _PAD] = recon

    return kernel


def _vmem():
    return pl.BlockSpec(memory_space=pltpu.MemorySpace.VMEM)


# --------------------------- parameter init / packing ------------------------

def _init_linear(key, din, dout):
    kw, kb = jax.random.split(key)
    bound = 1.0 / (din ** 0.5)
    w = jax.random.uniform(kw, (din, dout), jnp.float32, -bound, bound)
    b = jax.random.uniform(kb, (dout,), jnp.float32, -bound, bound)
    return w, b


def _init_bn(dout):
    return jnp.ones((dout,), jnp.float32), jnp.zeros((dout,), jnp.float32)


def init_params(key, input_dims, hidden_dims, latent_dim):
    params = {"encoders": [], "decoders": []}
    for dim in input_dims:
        enc_hidden, in_size = [], dim
        for hdim in hidden_dims:
            key, sk = jax.random.split(key)
            w, b = _init_linear(sk, in_size, hdim)
            g, bt = _init_bn(hdim)
            enc_hidden.append((w, b, g, bt))
            in_size = hdim
        key, sk = jax.random.split(key)
        enc_final = _init_linear(sk, hidden_dims[-1], latent_dim)
        params["encoders"].append({"hidden": enc_hidden, "final": enc_final})

        # decoder mirrors the PyTorch construction exactly (output dim ends up
        # being hidden_dims[0]).
        decoder_dims = list(reversed([*hidden_dims, dim]))
        dec_hidden, in_size = [], latent_dim
        for hdim in decoder_dims[:-1]:
            key, sk = jax.random.split(key)
            w, b = _init_linear(sk, in_size, hdim)
            g, bt = _init_bn(hdim)
            dec_hidden.append((w, b, g, bt))
            in_size = hdim
        key, sk = jax.random.split(key)
        dec_final = _init_linear(sk, decoder_dims[-2], decoder_dims[-1])
        params["decoders"].append({"hidden": dec_hidden, "final": dec_final})

    n_views = len(input_dims)
    key, sk = jax.random.split(key)
    fw, fb = _init_linear(sk, latent_dim * n_views, latent_dim)
    fg, fbt = _init_bn(latent_dim)
    params["fusion"] = (fw, fb, fg, fbt)

    key, sk1 = jax.random.split(key)
    p1w, p1b = _init_linear(sk1, latent_dim, latent_dim // 2)
    p1g, p1bt = _init_bn(latent_dim // 2)
    key, sk2 = jax.random.split(key)
    p2w, p2b = _init_linear(sk2, latent_dim // 2, latent_dim // 4)
    params["projection"] = ((p1w, p1b, p1g, p1bt), (p2w, p2b))
    return params


def _pad_mat(w):
    k, n = w.shape
    assert k <= _PAD and n <= _PAD, "layer width exceeds lane padding"
    return jnp.pad(w, ((0, _PAD - k), (0, _PAD - n)))


def _pad_vec(v):
    return jnp.pad(v, (0, _PAD - v.shape[0]))


def _block_diag(mats):
    rows = sum(m.shape[0] for m in mats)
    cols = sum(m.shape[1] for m in mats)
    out = jnp.zeros((rows, cols), jnp.float32)
    r = c = 0
    for m in mats:
        out = out.at[r:r + m.shape[0], c:c + m.shape[1]].set(m)
        r += m.shape[0]
        c += m.shape[1]
    return out


def pack_params(params):
    """Pack all layer weights into (L,128,128) and vectors into (L,2,128)."""
    w_list, v_list = [], []

    def add_bn(w, gamma, beta):
        # preceding Linear bias dropped: exact under batch-statistics BN
        w_list.append(_pad_mat(w))
        v_list.append(jnp.stack([_pad_vec(gamma), _pad_vec(beta)]))

    def add_lin(w, b):
        w_list.append(_pad_mat(w))
        v_list.append(jnp.stack([_pad_vec(b), jnp.zeros((_PAD,), jnp.float32)]))

    encs, decs = params["encoders"], params["decoders"]
    n_hidden = len(encs[0]["hidden"])

    for li in range(n_hidden):
        add_bn(_block_diag([e["hidden"][li][0] for e in encs]),
               jnp.concatenate([e["hidden"][li][2] for e in encs]),
               jnp.concatenate([e["hidden"][li][3] for e in encs]))
    add_lin(_block_diag([e["final"][0] for e in encs]),
            jnp.concatenate([e["final"][1] for e in encs]))

    fw, fb, fg, fbt = params["fusion"]
    add_bn(fw, fg, fbt)

    (p1w, p1b, p1g, p1bt), (p2w, p2b) = params["projection"]
    add_bn(p1w, p1g, p1bt)
    add_lin(p2w, p2b)

    for li in range(len(decs[0]["hidden"])):
        add_bn(_block_diag([d["hidden"][li][0] for d in decs]),
               jnp.concatenate([d["hidden"][li][2] for d in decs]),
               jnp.concatenate([d["hidden"][li][3] for d in decs]))
    add_lin(_block_diag([d["final"][0] for d in decs]),
            jnp.concatenate([d["final"][1] for d in decs]))

    meta = {
        "latent_dim": encs[0]["final"][0].shape[1],
        "recon_dim": decs[0]["final"][0].shape[1],
    }
    return jnp.stack(w_list), jnp.stack(v_list), meta


# ------------------------------ forward pass ---------------------------------

def forward(packed, views, masks=None):
    w_slab, v_slab, meta = packed
    latent_dim, recon_dim = meta["latent_dim"], meta["recon_dim"]
    if masks is None:
        masks = [jnp.ones_like(v) for v in views]

    n_hidden = (w_slab.shape[0] - 5) // 2
    batch = views[0].shape[0]
    dims = [v.shape[1] for v in views]

    xcat = jnp.concatenate(views, axis=1)
    mcat = jnp.concatenate(masks, axis=1)
    padw = _PAD - xcat.shape[1]
    xcat = jnp.pad(xcat, ((0, 0), (0, padw)))
    mcat = jnp.pad(mcat, ((0, 0), (0, padw)))

    out = pl.pallas_call(
        _make_fused_kernel(n_hidden),
        out_shape=jax.ShapeDtypeStruct((batch, 5 * _PAD), jnp.float32),
        in_specs=[_vmem()] * 4,
        out_specs=_vmem(),
    )(xcat, mcat, w_slab, v_slab)

    masked_views, view_embeddings, reconstructions = [], [], []
    off = 0
    for d in dims:
        masked_views.append(out[:, off:off + d]); off += d
    off = _PAD
    for _ in dims:
        view_embeddings.append(out[:, off:off + latent_dim]); off += latent_dim
    fused_embedding = out[:, 2 * _PAD:2 * _PAD + latent_dim]
    projection = out[:, 3 * _PAD:3 * _PAD + latent_dim // 4]
    off = 4 * _PAD
    for _ in dims:
        reconstructions.append(out[:, off:off + recon_dim]); off += recon_dim

    return {
        "fused_embedding": fused_embedding,
        "view_embeddings": view_embeddings,
        "reconstructions": reconstructions,
        "projection": projection,
        "masked_views": masked_views,
    }


# ------------------------- pure-JAX reference (check) ------------------------

def reference_forward(params, views, masks=None):
    if masks is None:
        masks = [jnp.ones_like(v) for v in views]

    def bn(y, g, b):
        mean = jnp.mean(y, axis=0, keepdims=True)
        var = jnp.mean(jnp.square(y - mean), axis=0, keepdims=True)
        return (y - mean) * jax.lax.rsqrt(var + _BN_EPS) * g + b

    view_embeddings, masked_views = [], []
    for view, mask, enc in zip(views, masks, params["encoders"]):
        x = view * mask
        masked_views.append(x)
        h = x
        for (w, b, g, bt) in enc["hidden"]:
            h = jnp.maximum(bn(h @ w + b, g, bt), 0.0)
        view_embeddings.append(h @ enc["final"][0] + enc["final"][1])

    concat = jnp.concatenate(view_embeddings, axis=1)
    fw, fb, fg, fbt = params["fusion"]
    fused = jnp.maximum(bn(concat @ fw + fb, fg, fbt), 0.0)

    (p1w, p1b, p1g, p1bt), (p2w, p2b) = params["projection"]
    proj = jnp.maximum(bn(fused @ p1w + p1b, p1g, p1bt), 0.0) @ p2w + p2b

    recons = []
    for emb, dec in zip(view_embeddings, params["decoders"]):
        h = emb
        for (w, b, g, bt) in dec["hidden"]:
            h = jnp.maximum(bn(h @ w + b, g, bt), 0.0)
        recons.append(h @ dec["final"][0] + dec["final"][1])

    return {
        "fused_embedding": fused,
        "view_embeddings": view_embeddings,
        "reconstructions": recons,
        "projection": proj,
        "masked_views": masked_views,
    }


# ----------------------------------- driver ----------------------------------

if __name__ == "__main__":
    input_dims = [20, 24]     # two views
    hidden_dims = [32, 16]
    latent_dim = 16
    batch = 8

    key = jax.random.PRNGKey(0)
    pkey, v0k, v1k = jax.random.split(key, 3)
    params = init_params(pkey, input_dims, hidden_dims, latent_dim)
    packed = pack_params(params)

    views = [
        jax.random.normal(v0k, (batch, input_dims[0]), jnp.float32),
        jax.random.normal(v1k, (batch, input_dims[1]), jnp.float32),
    ]

    out = forward(packed, views)
    out = jax.block_until_ready(out)

    # shape checks mirroring the PyTorch module
    assert out["fused_embedding"].shape == (batch, latent_dim)
    assert out["projection"].shape == (batch, latent_dim // 4)
    assert all(e.shape == (batch, latent_dim) for e in out["view_embeddings"])
    assert all(r.shape == (batch, hidden_dims[0]) for r in out["reconstructions"])
    assert all(m.shape == v.shape for m, v in zip(out["masked_views"], views))

    # numerical check against the un-fused pure-JAX reference
    ref = reference_forward(params, views)
    tol = dict(atol=1e-3, rtol=1e-3)
    assert jnp.allclose(out["fused_embedding"], ref["fused_embedding"], **tol)
    assert jnp.allclose(out["projection"], ref["projection"], **tol)
    for a, b in zip(out["view_embeddings"], ref["view_embeddings"]):
        assert jnp.allclose(a, b, **tol)
    for a, b in zip(out["reconstructions"], ref["reconstructions"]):
        assert jnp.allclose(a, b, **tol)
    for a, b in zip(out["masked_views"], ref["masked_views"]):
        assert jnp.allclose(a, b, **tol)

    print("KERNEL_OK")
</pallas_src>

<mosaic_0001>
module attributes {stable_mosaic.version = 11 : i64} {
  func.func @kernel(%arg0: memref<8x128xf32, #tpu.memory_space<vmem>>, %arg1: memref<8x128xf32, #tpu.memory_space<vmem>>, %arg2: memref<9x128x128xf32, #tpu.memory_space<vmem>>, %arg3: memref<9x2x128xf32, #tpu.memory_space<vmem>>, %arg4: memref<8x640xf32, #tpu.memory_space<vmem>>) attributes {dimension_semantics = [], scalar_prefetch = 0 : i64, scratch_operands = 0 : i64, tpu.core_type = #tpu.core_type<tc>} {
    %c0 = arith.constant 0 : index
    %c0_0 = arith.constant 0 : index
    %0 = vector.load %arg0[%c0, %c0_0] : memref<8x128xf32, #tpu.memory_space<vmem>>, vector<8x128xf32>
    %c0_1 = arith.constant 0 : index
    %c0_2 = arith.constant 0 : index
    %1 = vector.load %arg1[%c0_1, %c0_2] : memref<8x128xf32, #tpu.memory_space<vmem>>, vector<8x128xf32>
    %2 = arith.mulf %0, %1 : vector<8x128xf32>
    %c0_3 = arith.constant 0 : index
    %c0_4 = arith.constant 0 : index
    %3 = vector.load %arg4[%c0_3, %c0_4] : memref<8x640xf32, #tpu.memory_space<vmem>>, vector<8x128xf32>
    tpu.vector_store %arg4[%c0_3, %c0_4], %2 {strides = array<i32>} : memref<8x640xf32, #tpu.memory_space<vmem>>, vector<8x128xf32>,
    %c0_5 = arith.constant 0 : index
    %c0_6 = arith.constant 0 : index
    %c0_7 = arith.constant 0 : index
    %4 = vector.load %arg2[%c0_5, %c0_6, %c0_7] : memref<9x128x128xf32, #tpu.memory_space<vmem>>, vector<1x128x128xf32>
    %5 = vector.shape_cast %4 : vector<1x128x128xf32> to vector<128x128xf32>
    %cst = arith.constant dense<0.000000e+00> : vector<8x128xf32>
    %6 = tpu.matmul %2, %5, %cst {dimension_numbers = #tpu.dot_dimension_numbers<[1], [0], [0], [1], [0, 0, 1, 1], [], []>} : vector<8x128xf32>, vector<128x128xf32>, vector<8x128xf32> -> vector<8x128xf32>
    %c0_8 = arith.constant 0 : index
    %c0_9 = arith.constant 0 : index
    %c0_10 = arith.constant 0 : index
    %7 = vector.load %arg3[%c0_8, %c0_9, %c0_10] : memref<9x2x128xf32, #tpu.memory_space<vmem>>, vector<1x2x128xf32>
    %8 = vector.shape_cast %7 : vector<1x2x128xf32> to vector<2x128xf32>
    %cst_11 = arith.constant dense<0.000000e+00> : vector<128xf32>
    %9 = vector.multi_reduction <add>, %6, %cst_11 [0] : vector<8x128xf32> to vector<128xf32>
    %10 = vector.shape_cast %9 : vector<128xf32> to vector<1x128xf32>
    %cst_12 = arith.constant 8.000000e+00 : f32
    %11 = vector.broadcast %cst_12 : f32 to vector<1x128xf32>
    %12 = arith.divf %10, %11 : vector<1x128xf32>
    %13 = arith.mulf %6, %6 : vector<8x128xf32>
    %cst_13 = arith.constant dense<0.000000e+00> : vector<128xf32>
    %14 = vector.multi_reduction <add>, %13, %cst_13 [0] : vector<8x128xf32> to vector<128xf32>
    %15 = vector.shape_cast %14 : vector<128xf32> to vector<1x128xf32>
    %cst_14 = arith.constant 8.000000e+00 : f32
    %16 = vector.broadcast %cst_14 : f32 to vector<1x128xf32>
    %17 = arith.divf %15, %16 : vector<1x128xf32>
    %18 = arith.mulf %12, %12 : vector<1x128xf32>
    %19 = arith.subf %17, %18 : vector<1x128xf32>
    %cst_15 = arith.constant 9.99999974E-6 : f32
    %20 = vector.broadcast %cst_15 : f32 to vector<1x128xf32>
    %21 = arith.addf %19, %20 : vector<1x128xf32>
    %22 = math.rsqrt %21 : vector<1x128xf32>
    %23 = vector.extract_strided_slice %8 {offsets = [0, 0], sizes = [1, 128], strides = [1, 1]} : vector<2x128xf32> to vector<1x128xf32>
    %24 = arith.mulf %22, %23 : vector<1x128xf32>
    %25 = vector.broadcast %12 : vector<1x128xf32> to vector<8x128xf32>
    %26 = arith.subf %6, %25 : vector<8x128xf32>
    %27 = vector.broadcast %24 : vector<1x128xf32> to vector<8x128xf32>
    %28 = arith.mulf %26, %27 : vector<8x128xf32>
    %29 = vector.extract_strided_slice %8 {offsets = [1, 0], sizes = [1, 128], strides = [1, 1]} : vector<2x128xf32> to vector<1x128xf32>
    %30 = vector.broadcast %29 : vector<1x128xf32> to vector<8x128xf32>
    %31 = arith.addf %28, %30 : vector<8x128xf32>
    %cst_16 = arith.constant 0.000000e+00 : f32
    %32 = vector.broadcast %cst_16 : f32 to vector<8x128xf32>
    %33 = arith.maximumf %31, %32 : vector<8x128xf32>
    %c1 = arith.constant 1 : index
    %c0_17 = arith.constant 0 : index
    %c0_18 = arith.constant 0 : index
    %34 = vector.load %arg2[%c1, %c0_17, %c0_18] : memref<9x128x128xf32, #tpu.memory_space<vmem>>, vector<1x128x128xf32>
    %35 = vector.shape_cast %34 : vector<1x128x128xf32> to vector<128x128xf32>
    %cst_19 = arith.constant dense<0.000000e+00> : vector<8x128xf32>
    %36 = tpu.matmul %33, %35, %cst_19 {dimension_numbers = #tpu.dot_dimension_numbers<[1], [0], [0], [1], [0, 0, 1, 1], [], []>} : vector<8x128xf32>, vector<128x128xf32>, vector<8x128xf32> -> vector<8x128xf32>
    %c1_20 = arith.constant 1 : index
    %c0_21 = arith.constant 0 : index
    %c0_22 = arith.constant 0 : index
    %37 = vector.load %arg3[%c1_20, %c0_21, %c0_22] : memref<9x2x128xf32, #tpu.memory_space<vmem>>, vector<1x2x128xf32>
    %38 = vector.shape_cast %37 : vector<1x2x128xf32> to vector<2x128xf32>
    %cst_23 = arith.constant dense<0.000000e+00> : vector<128xf32>
    %39 = vector.multi_reduction <add>, %36, %cst_23 [0] : vector<8x128xf32> to vector<128xf32>
    %40 = vector.shape_cast %39 : vector<128xf32> to vector<1x128xf32>
    %cst_24 = arith.constant 8.000000e+00 : f32
    %41 = vector.broadcast %cst_24 : f32 to vector<1x128xf32>
    %42 = arith.divf %40, %41 : vector<1x128xf32>
    %43 = arith.mulf %36, %36 : vector<8x128xf32>
    %cst_25 = arith.constant dense<0.000000e+00> : vector<128xf32>
    %44 = vector.multi_reduction <add>, %43, %cst_25 [0] : vector<8x128xf32> to vector<128xf32>
    %45 = vector.shape_cast %44 : vector<128xf32> to vector<1x128xf32>
    %cst_26 = arith.constant 8.000000e+00 : f32
    %46 = vector.broadcast %cst_26 : f32 to vector<1x128xf32>
    %47 = arith.divf %45, %46 : vector<1x128xf32>
    %48 = arith.mulf %42, %42 : vector<1x128xf32>
    %49 = arith.subf %47, %48 : vector<1x128xf32>
    %cst_27 = arith.constant 9.99999974E-6 : f32
    %50 = vector.broadcast %cst_27 : f32 to vector<1x128xf32>
    %51 = arith.addf %49, %50 : vector<1x128xf32>
    %52 = math.rsqrt %51 : vector<1x128xf32>
    %53 = vector.extract_strided_slice %38 {offsets = [0, 0], sizes = [1, 128], strides = [1, 1]} : vector<2x128xf32> to vector<1x128xf32>
    %54 = arith.mulf %52, %53 : vector<1x128xf32>
    %55 = vector.broadcast %42 : vector<1x128xf32> to vector<8x128xf32>
    %56 = arith.subf %36, %55 : vector<8x128xf32>
    %57 = vector.broadcast %54 : vector<1x128xf32> to vector<8x128xf32>
    %58 = arith.mulf %56, %57 : vector<8x128xf32>
    %59 = vector.extract_strided_slice %38 {offsets = [1, 0], sizes = [1, 128], strides = [1, 1]} : vector<2x128xf32> to vector<1x128xf32>
    %60 = vector.broadcast %59 : vector<1x128xf32> to vector<8x128xf32>
    %61 = arith.addf %58, %60 : vector<8x128xf32>
    %cst_28 = arith.constant 0.000000e+00 : f32
    %62 = vector.broadcast %cst_28 : f32 to vector<8x128xf32>
    %63 = arith.maximumf %61, %62 : vector<8x128xf32>
    %c2 = arith.constant 2 : index
    %c0_29 = arith.constant 0 : index
    %c0_30 = arith.constant 0 : index
    %64 = vector.load %arg2[%c2, %c0_29, %c0_30] : memref<9x128x128xf32, #tpu.memory_space<vmem>>, vector<1x128x128xf32>
    %65 = vector.shape_cast %64 : vector<1x128x128xf32> to vector<128x128xf32>
    %cst_31 = arith.constant dense<0.000000e+00> : vector<8x128xf32>
    %66 = tpu.matmul %63, %65, %cst_31 {dimension_numbers = #tpu.dot_dimension_numbers<[1], [0], [0], [1], [0, 0, 1, 1], [], []>} : vector<8x128xf32>, vector<128x128xf32>, vector<8x128xf32> -> vector<8x128xf32>
    %c2_32 = arith.constant 2 : index
    %c0_33 = arith.constant 0 : index
    %c0_34 = arith.constant 0 : index
    %67 = vector.load %arg3[%c2_32, %c0_33, %c0_34] : memref<9x2x128xf32, #tpu.memory_space<vmem>>, vector<1x2x128xf32>
    %68 = vector.shape_cast %67 : vector<1x2x128xf32> to vector<2x128xf32>
    %69 = vector.extract_strided_slice %68 {offsets = [0, 0], sizes = [1, 128], strides = [1, 1]} : vector<2x128xf32> to vector<1x128xf32>
    %70 = vector.broadcast %69 : vector<1x128xf32> to vector<8x128xf32>
    %71 = arith.addf %66, %70 : vector<8x128xf32>
    %c0_35 = arith.constant 0 : index
    %c128 = arith.constant 128 : index
    %72 = vector.load %arg4[%c0_35, %c128] : memref<8x640xf32, #tpu.memory_space<vmem>>, vector<8x128xf32>
    tpu.vector_store %arg4[%c0_35, %c128], %71 {strides = array<i32>} : memref<8x640xf32, #tpu.memory_space<vmem>>, vector<8x128xf32>,
    %c3 = arith.constant 3 : index
    %c0_36 = arith.constant 0 : index
    %c0_37 = arith.constant 0 : index
    %73 = vector.load %arg2[%c3, %c0_36, %c0_37] : memref<9x128x128xf32, #tpu.memory_space<vmem>>, vector<1x128x128xf32>
    %74 = vector.shape_cast %73 : vector<1x128x128xf32> to vector<128x128xf32>
    %cst_38 = arith.constant dense<0.000000e+00> : vector<8x128xf32>
    %75 = tpu.matmul %71, %74, %cst_38 {dimension_numbers = #tpu.dot_dimension_numbers<[1], [0], [0], [1], [0, 0, 1, 1], [], []>} : vector<8x128xf32>, vector<128x128xf32>, vector<8x128xf32> -> vector<8x128xf32>
    %c3_39 = arith.constant 3 : index
    %c0_40 = arith.constant 0 : index
    %c0_41 = arith.constant 0 : index
    %76 = vector.load %arg3[%c3_39, %c0_40, %c0_41] : memref<9x2x128xf32, #tpu.memory_space<vmem>>, vector<1x2x128xf32>
    %77 = vector.shape_cast %76 : vector<1x2x128xf32> to vector<2x128xf32>
    %cst_42 = arith.constant dense<0.000000e+00> : vector<128xf32>
    %78 = vector.multi_reduction <add>, %75, %cst_42 [0] : vector<8x128xf32> to vector<128xf32>
    %79 = vector.shape_cast %78 : vector<128xf32> to vector<1x128xf32>
    %cst_43 = arith.constant 8.000000e+00 : f32
    %80 = vector.broadcast %cst_43 : f32 to vector<1x128xf32>
    %81 = arith.divf %79, %80 : vector<1x128xf32>
    %82 = arith.mulf %75, %75 : vector<8x128xf32>
    %cst_44 = arith.constant dense<0.000000e+00> : vector<128xf32>
    %83 = vector.multi_reduction <add>, %82, %cst_44 [0] : vector<8x128xf32> to vector<128xf32>
    %84 = vector.shape_cast %83 : vector<128xf32> to vector<1x128xf32>
    %cst_45 = arith.constant 8.000000e+00 : f32
    %85 = vector.broadcast %cst_45 : f32 to vector<1x128xf32>
    %86 = arith.divf %84, %85 : vector<1x128xf32>
    %87 = arith.mulf %81, %81 : vector<1x128xf32>
    %88 = arith.subf %86, %87 : vector<1x128xf32>
    %cst_46 = arith.constant 9.99999974E-6 : f32
    %89 = vector.broadcast %cst_46 : f32 to vector<1x128xf32>
    %90 = arith.addf %88, %89 : vector<1x128xf32>
    %91 = math.rsqrt %90 : vector<1x128xf32>
    %92 = vector.extract_strided_slice %77 {offsets = [0, 0], sizes = [1, 128], strides = [1, 1]} : vector<2x128xf32> to vector<1x128xf32>
    %93 = arith.mulf %91, %92 : vector<1x128xf32>
    %94 = vector.broadcast %81 : vector<1x128xf32> to vector<8x128xf32>
    %95 = arith.subf %75, %94 : vector<8x128xf32>
    %96 = vector.broadcast %93 : vector<1x128xf32> to vector<8x128xf32>
    %97 = arith.mulf %95, %96 : vector<8x128xf32>
    %98 = vector.extract_strided_slice %77 {offsets = [1, 0], sizes = [1, 128], strides = [1, 1]} : vector<2x128xf32> to vector<1x128xf32>
    %99 = vector.broadcast %98 : vector<1x128xf32> to vector<8x128xf32>
    %100 = arith.addf %97, %99 : vector<8x128xf32>
    %cst_47 = arith.constant 0.000000e+00 : f32
    %101 = vector.broadcast %cst_47 : f32 to vector<8x128xf32>
    %102 = arith.maximumf %100, %101 : vector<8x128xf32>
    %c0_48 = arith.constant 0 : index
    %c256 = arith.constant 256 : index
    %103 = vector.load %arg4[%c0_48, %c256] : memref<8x640xf32, #tpu.memory_space<vmem>>, vector<8x128xf32>
    tpu.vector_store %arg4[%c0_48, %c256], %102 {strides = array<i32>} : memref<8x640xf32, #tpu.memory_space<vmem>>, vector<8x128xf32>,
    %c4 = arith.constant 4 : index
    %c0_49 = arith.constant 0 : index
    %c0_50 = arith.constant 0 : index
    %104 = vector.load %arg2[%c4, %c0_49, %c0_50] : memref<9x128x128xf32, #tpu.memory_space<vmem>>, vector<1x128x128xf32>
    %105 = vector.shape_cast %104 : vector<1x128x128xf32> to vector<128x128xf32>
    %cst_51 = arith.constant dense<0.000000e+00> : vector<8x128xf32>
    %106 = tpu.matmul %102, %105, %cst_51 {dimension_numbers = #tpu.dot_dimension_numbers<[1], [0], [0], [1], [0, 0, 1, 1], [], []>} : vector<8x128xf32>, vector<128x128xf32>, vector<8x128xf32> -> vector<8x128xf32>
    %c4_52 = arith.constant 4 : index
    %c0_53 = arith.constant 0 : index
    %c0_54 = arith.constant 0 : index
    %107 = vector.load %arg3[%c4_52, %c0_53, %c0_54] : memref<9x2x128xf32, #tpu.memory_space<vmem>>, vector<1x2x128xf32>
    %108 = vector.shape_cast %107 : vector<1x2x128xf32> to vector<2x128xf32>
    %cst_55 = arith.constant dense<0.000000e+00> : vector<128xf32>
    %109 = vector.multi_reduction <add>, %106, %cst_55 [0] : vector<8x128xf32> to vector<128xf32>
    %110 = vector.shape_cast %109 : vector<128xf32> to vector<1x128xf32>
    %cst_56 = arith.constant 8.000000e+00 : f32
    %111 = vector.broadcast %cst_56 : f32 to vector<1x128xf32>
    %112 = arith.divf %110, %111 : vector<1x128xf32>
    %113 = arith.mulf %106, %106 : vector<8x128xf32>
    %cst_57 = arith.constant dense<0.000000e+00> : vector<128xf32>
    %114 = vector.multi_reduction <add>, %113, %cst_57 [0] : vector<8x128xf32> to vector<128xf32>
    %115 = vector.shape_cast %114 : vector<128xf32> to vector<1x128xf32>
    %cst_58 = arith.constant 8.000000e+00 : f32
    %116 = vector.broadcast %cst_58 : f32 to vector<1x128xf32>
    %117 = arith.divf %115, %116 : vector<1x128xf32>
    %118 = arith.mulf %112, %112 : vector<1x128xf32>
    %119 = arith.subf %117, %118 : vector<1x128xf32>
    %cst_59 = arith.constant 9.99999974E-6 : f32
    %120 = vector.broadcast %cst_59 : f32 to vector<1x128xf32>
    %121 = arith.addf %119, %120 : vector<1x128xf32>
    %122 = math.rsqrt %121 : vector<1x128xf32>
    %123 = vector.extract_strided_slice %108 {offsets = [0, 0], sizes = [1, 128], strides = [1, 1]} : vector<2x128xf32> to vector<1x128xf32>
    %124 = arith.mulf %122, %123 : vector<1x128xf32>
    %125 = vector.broadcast %112 : vector<1x128xf32> to vector<8x128xf32>
    %126 = arith.subf %106, %125 : vector<8x128xf32>
    %127 = vector.broadcast %124 : vector<1x128xf32> to vector<8x128xf32>
    %128 = arith.mulf %126, %127 : vector<8x128xf32>
    %129 = vector.extract_strided_slice %108 {offsets = [1, 0], sizes = [1, 128], strides = [1, 1]} : vector<2x128xf32> to vector<1x128xf32>
    %130 = vector.broadcast %129 : vector<1x128xf32> to vector<8x128xf32>
    %131 = arith.addf %128, %130 : vector<8x128xf32>
    %cst_60 = arith.constant 0.000000e+00 : f32
    %132 = vector.broadcast %cst_60 : f32 to vector<8x128xf32>
    %133 = arith.maximumf %131, %132 : vector<8x128xf32>
    %c5 = arith.constant 5 : index
    %c0_61 = arith.constant 0 : index
    %c0_62 = arith.constant 0 : index
    %134 = vector.load %arg2[%c5, %c0_61, %c0_62] : memref<9x128x128xf32, #tpu.memory_space<vmem>>, vector<1x128x128xf32>
    %135 = vector.shape_cast %134 : vector<1x128x128xf32> to vector<128x128xf32>
    %cst_63 = arith.constant dense<0.000000e+00> : vector<8x128xf32>
    %136 = tpu.matmul %133, %135, %cst_63 {dimension_numbers = #tpu.dot_dimension_numbers<[1], [0], [0], [1], [0, 0, 1, 1], [], []>} : vector<8x128xf32>, vector<128x128xf32>, vector<8x128xf32> -> vector<8x128xf32>
    %c5_64 = arith.constant 5 : index
    %c0_65 = arith.constant 0 : index
    %c0_66 = arith.constant 0 : index
    %137 = vector.load %arg3[%c5_64, %c0_65, %c0_66] : memref<9x2x128xf32, #tpu.memory_space<vmem>>, vector<1x2x128xf32>
    %138 = vector.shape_cast %137 : vector<1x2x128xf32> to vector<2x128xf32>
    %139 = vector.extract_strided_slice %138 {offsets = [0, 0], sizes = [1, 128], strides = [1, 1]} : vector<2x128xf32> to vector<1x128xf32>
    %140 = vector.broadcast %139 : vector<1x128xf32> to vector<8x128xf32>
    %141 = arith.addf %136, %140 : vector<8x128xf32>
    %c0_67 = arith.constant 0 : index
    %c384 = arith.constant 384 : index
    %142 = vector.load %arg4[%c0_67, %c384] : memref<8x640xf32, #tpu.memory_space<vmem>>, vector<8x128xf32>
    tpu.vector_store %arg4[%c0_67, %c384], %141 {strides = array<i32>} : memref<8x640xf32, #tpu.memory_space<vmem>>, vector<8x128xf32>,
    %c6 = arith.constant 6 : index
    %c0_68 = arith.constant 0 : index
    %c0_69 = arith.constant 0 : index
    %143 = vector.load %arg2[%c6, %c0_68, %c0_69] : memref<9x128x128xf32, #tpu.memory_space<vmem>>, vector<1x128x128xf32>
    %144 = vector.shape_cast %143 : vector<1x128x128xf32> to vector<128x128xf32>
    %cst_70 = arith.constant dense<0.000000e+00> : vector<8x128xf32>
    %145 = tpu.matmul %71, %144, %cst_70 {dimension_numbers = #tpu.dot_dimension_numbers<[1], [0], [0], [1], [0, 0, 1, 1], [], []>} : vector<8x128xf32>, vector<128x128xf32>, vector<8x128xf32> -> vector<8x128xf32>
    %c6_71 = arith.constant 6 : index
    %c0_72 = arith.constant 0 : index
    %c0_73 = arith.constant 0 : index
    %146 = vector.load %arg3[%c6_71, %c0_72, %c0_73] : memref<9x2x128xf32, #tpu.memory_space<vmem>>, vector<1x2x128xf32>
    %147 = vector.shape_cast %146 : vector<1x2x128xf32> to vector<2x128xf32>
    %cst_74 = arith.constant dense<0.000000e+00> : vector<128xf32>
    %148 = vector.multi_reduction <add>, %145, %cst_74 [0] : vector<8x128xf32> to vector<128xf32>
    %149 = vector.shape_cast %148 : vector<128xf32> to vector<1x128xf32>
    %cst_75 = arith.constant 8.000000e+00 : f32
    %150 = vector.broadcast %cst_75 : f32 to vector<1x128xf32>
    %151 = arith.divf %149, %150 : vector<1x128xf32>
    %152 = arith.mulf %145, %145 : vector<8x128xf32>
    %cst_76 = arith.constant dense<0.000000e+00> : vector<128xf32>
    %153 = vector.multi_reduction <add>, %152, %cst_76 [0] : vector<8x128xf32> to vector<128xf32>
    %154 = vector.shape_cast %153 : vector<128xf32> to vector<1x128xf32>
    %cst_77 = arith.constant 8.000000e+00 : f32
    %155 = vector.broadcast %cst_77 : f32 to vector<1x128xf32>
    %156 = arith.divf %154, %155 : vector<1x128xf32>
    %157 = arith.mulf %151, %151 : vector<1x128xf32>
    %158 = arith.subf %156, %157 : vector<1x128xf32>
    %cst_78 = arith.constant 9.99999974E-6 : f32
    %159 = vector.broadcast %cst_78 : f32 to vector<1x128xf32>
    %160 = arith.addf %158, %159 : vector<1x128xf32>
    %161 = math.rsqrt %160 : vector<1x128xf32>
    %162 = vector.extract_strided_slice %147 {offsets = [0, 0], sizes = [1, 128], strides = [1, 1]} : vector<2x128xf32> to vector<1x128xf32>
    %163 = arith.mulf %161, %162 : vector<1x128xf32>
    %164 = vector.broadcast %151 : vector<1x128xf32> to vector<8x128xf32>
    %165 = arith.subf %145, %164 : vector<8x128xf32>
    %166 = vector.broadcast %163 : vector<1x128xf32> to vector<8x128xf32>
    %167 = arith.mulf %165, %166 : vector<8x128xf32>
    %168 = vector.extract_strided_slice %147 {offsets = [1, 0], sizes = [1, 128], strides = [1, 1]} : vector<2x128xf32> to vector<1x128xf32>
    %169 = vector.broadcast %168 : vector<1x128xf32> to vector<8x128xf32>
    %170 = arith.addf %167, %169 : vector<8x128xf32>
    %cst_79 = arith.constant 0.000000e+00 : f32
    %171 = vector.broadcast %cst_79 : f32 to vector<8x128xf32>
    %172 = arith.maximumf %170, %171 : vector<8x128xf32>
    %c7 = arith.constant 7 : index
    %c0_80 = arith.constant 0 : index
    %c0_81 = arith.constant 0 : index
    %173 = vector.load %arg2[%c7, %c0_80, %c0_81] : memref<9x128x128xf32, #tpu.memory_space<vmem>>, vector<1x128x128xf32>
    %174 = vector.shape_cast %173 : vector<1x128x128xf32> to vector<128x128xf32>
    %cst_82 = arith.constant dense<0.000000e+00> : vector<8x128xf32>
    %175 = tpu.matmul %172, %174, %cst_82 {dimension_numbers = #tpu.dot_dimension_numbers<[1], [0], [0], [1], [0, 0, 1, 1], [], []>} : vector<8x128xf32>, vector<128x128xf32>, vector<8x128xf32> -> vector<8x128xf32>
    %c7_83 = arith.constant 7 : index
    %c0_84 = arith.constant 0 : index
    %c0_85 = arith.constant 0 : index
    %176 = vector.load %arg3[%c7_83, %c0_84, %c0_85] : memref<9x2x128xf32, #tpu.memory_space<vmem>>, vector<1x2x128xf32>
    %177 = vector.shape_cast %176 : vector<1x2x128xf32> to vector<2x128xf32>
    %cst_86 = arith.constant dense<0.000000e+00> : vector<128xf32>
    %178 = vector.multi_reduction <add>, %175, %cst_86 [0] : vector<8x128xf32> to vector<128xf32>
    %179 = vector.shape_cast %178 : vector<128xf32> to vector<1x128xf32>
    %cst_87 = arith.constant 8.000000e+00 : f32
    %180 = vector.broadcast %cst_87 : f32 to vector<1x128xf32>
    %181 = arith.divf %179, %180 : vector<1x128xf32>
    %182 = arith.mulf %175, %175 : vector<8x128xf32>
    %cst_88 = arith.constant dense<0.000000e+00> : vector<128xf32>
    %183 = vector.multi_reduction <add>, %182, %cst_88 [0] : vector<8x128xf32> to vector<128xf32>
    %184 = vector.shape_cast %183 : vector<128xf32> to vector<1x128xf32>
    %cst_89 = arith.constant 8.000000e+00 : f32
    %185 = vector.broadcast %cst_89 : f32 to vector<1x128xf32>
    %186 = arith.divf %184, %185 : vector<1x128xf32>
    %187 = arith.mulf %181, %181 : vector<1x128xf32>
    %188 = arith.subf %186, %187 : vector<1x128xf32>
    %cst_90 = arith.constant 9.99999974E-6 : f32
    %189 = vector.broadcast %cst_90 : f32 to vector<1x128xf32>
    %190 = arith.addf %188, %189 : vector<1x128xf32>
    %191 = math.rsqrt %190 : vector<1x128xf32>
    %192 = vector.extract_strided_slice %177 {offsets = [0, 0], sizes = [1, 128], strides = [1, 1]} : vector<2x128xf32> to vector<1x128xf32>
    %193 = arith.mulf %191, %192 : vector<1x128xf32>
    %194 = vector.broadcast %181 : vector<1x128xf32> to vector<8x128xf32>
    %195 = arith.subf %175, %194 : vector<8x128xf32>
    %196 = vector.broadcast %193 : vector<1x128xf32> to vector<8x128xf32>
    %197 = arith.mulf %195, %196 : vector<8x128xf32>
    %198 = vector.extract_strided_slice %177 {offsets = [1, 0], sizes = [1, 128], strides = [1, 1]} : vector<2x128xf32> to vector<1x128xf32>
    %199 = vector.broadcast %198 : vector<1x128xf32> to vector<8x128xf32>
    %200 = arith.addf %197, %199 : vector<8x128xf32>
    %cst_91 = arith.constant 0.000000e+00 : f32
    %201 = vector.broadcast %cst_91 : f32 to vector<8x128xf32>
    %202 = arith.maximumf %200, %201 : vector<8x128xf32>
    %c8 = arith.constant 8 : index
    %c0_92 = arith.constant 0 : index
    %c0_93 = arith.constant 0 : index
    %203 = vector.load %arg2[%c8, %c0_92, %c0_93] : memref<9x128x128xf32, #tpu.memory_space<vmem>>, vector<1x128x128xf32>
    %204 = vector.shape_cast %203 : vector<1x128x128xf32> to vector<128x128xf32>
    %cst_94 = arith.constant dense<0.000000e+00> : vector<8x128xf32>
    %205 = tpu.matmul %202, %204, %cst_94 {dimension_numbers = #tpu.dot_dimension_numbers<[1], [0], [0], [1], [0, 0, 1, 1], [], []>} : vector<8x128xf32>, vector<128x128xf32>, vector<8x128xf32> -> vector<8x128xf32>
    %c8_95 = arith.constant 8 : index
    %c0_96 = arith.constant 0 : index
    %c0_97 = arith.constant 0 : index
    %206 = vector.load %arg3[%c8_95, %c0_96, %c0_97] : memref<9x2x128xf32, #tpu.memory_space<vmem>>, vector<1x2x128xf32>
    %207 = vector.shape_cast %206 : vector<1x2x128xf32> to vector<2x128xf32>
    %208 = vector.extract_strided_slice %207 {offsets = [0, 0], sizes = [1, 128], strides = [1, 1]} : vector<2x128xf32> to vector<1x128xf32>
    %209 = vector.broadcast %208 : vector<1x128xf32> to vector<8x128xf32>
    %210 = arith.addf %205, %209 : vector<8x128xf32>
    %c0_98 = arith.constant 0 : index
    %c512 = arith.constant 512 : index
    %211 = vector.load %arg4[%c0_98, %c512] : memref<8x640xf32, #tpu.memory_space<vmem>>, vector<8x128xf32>
    tpu.vector_store %arg4[%c0_98, %c512], %210 {strides = array<i32>} : memref<8x640xf32, #tpu.memory_space<vmem>>, vector<8x128xf32>,
    return
  }
}

</mosaic_0001>

<llo_original>
// kernel: tpu_custom_call.1
$region0: #{tpu_custom_call.1}
  #allocation0 [shape = 'u32[]', space=smem, size = 0x4, offset = 0x4, fixed_abs, tag = 'smem constant byte address 0x4 - core index']
  #allocation1 [shape = 'u32[144,128]{1,0:T(1,128)}', space=vmem, size = 0x12000, scoped, tag = 'internal scratch']
  %s0 = inlined_call_operand.hbm [shape: f32[8,128], index: 0, kind: input, shape index: {}]
  %s1 = inlined_call_operand.hbm [shape: f32[8,128], index: 1, kind: input, shape index: {}]
  %s2 = inlined_call_operand.hbm [shape: f32[9,128,128], index: 2, kind: input, shape index: {}]
  %s3 = inlined_call_operand.hbm [shape: f32[9,2,128], index: 3, kind: input, shape index: {}]
  %s4 = inlined_call_operand.hbm [shape: f32[8,640], index: 4, kind: output, shape index: {}]
  %s5 = sld [smem:[#allocation0]]
  $region42: #{tpu_custom_call.1} parent=0
    _
  %s7 = ssub.s32 1, %s5
  %s8 = scalar_select 0, %s7, %s5
  $region1: #{tpu_custom_call.1} parent=0
    #allocation2 [shape = 'u8[4096]{0}', space=vmem, size = 0x1000, scoped, tag = 'input window, operand 0, single buffered']
    #allocation3 [shape = 's32[1]{0}', space=sflag, size = 0x4, scoped, tag = 'scoped memory for tpu_custom_call.1']
    #allocation4 [shape = 's32[1]{0}', space=sflag, size = 0x4, scoped, tag = 'scoped memory for tpu_custom_call.1']
    #allocation5 [shape = 'u8[4096]{0}', space=vmem, size = 0x1000, scoped, tag = 'input window, operand 1, single buffered']
    #allocation6 [shape = 's32[1]{0}', space=sflag, size = 0x4, scoped, tag = 'scoped memory for tpu_custom_call.1']
    #allocation7 [shape = 'u8[589824]{0}', space=vmem, size = 0x90000, scoped, tag = 'input window, operand 2, single buffered']
    #allocation8 [shape = 'u8[9216]{0}', space=vmem, size = 0x2400, scoped, tag = 'input window, operand 3, single buffered']
    #allocation9 [shape = 's32[1]{0}', space=sflag, size = 0x4, scoped, tag = 'scoped memory for tpu_custom_call.1']
    #allocation10 [shape = 'u8[20480]{0}', space=vmem, size = 0x5000, scoped, tag = 'output window, operand 0, single buffered']
    %9 = vsyncpa [#allocation3], 0
    %10 = vsyncpa [#allocation6], 0
    %11 = vsyncpa [#allocation9], 0
    %12 = vsyncpa [#allocation4], 0
    // Predicated region
    $region2: #{tpu_custom_call.1} parent=1 // pred_check
      _
    $region3: #{tpu_custom_call.1} parent=1 // pred_check_branch
      %14 = sbr.rel (0) target = $region5
    $region4: #{tpu_custom_call.1} parent=1 // pred_region
      %s16 = ssub.s32 128, 128
      %17 = vsyncadd [#allocation3], %s16
      %s19 = sshll.u32 [#allocation2], 4
      %s20 = int_to_ptr.vmem [resolvable:$true] %s19
      %22 = dma.hbm_to_vmem [thread:$0]  %s0, 128, %s20, [#allocation3]
    $region5: #{tpu_custom_call.1} parent=1 // pred_fallthru
      _
    // Predicated region
    $region6: #{tpu_custom_call.1} parent=1 // pred_check
      _
    $region7: #{tpu_custom_call.1} parent=1 // pred_check_branch
      %24 = sbr.rel (0) target = $region9
    $region8: #{tpu_custom_call.1} parent=1 // pred_region
      %s26 = ssub.s32 128, 128
      %27 = vsyncadd [#allocation6], %s26
      %s29 = sshll.u32 [#allocation5], 4
      %s30 = int_to_ptr.vmem [resolvable:$true] %s29
      %32 = dma.hbm_to_vmem [thread:$0]  %s1, 128, %s30, [#allocation6]
    $region9: #{tpu_custom_call.1} parent=1 // pred_fallthru
      _
    // Predicated region
    $region10: #{tpu_custom_call.1} parent=1 // pred_check
      _
    $region11: #{tpu_custom_call.1} parent=1 // pred_check_branch
      %34 = sbr.rel (0) target = $region13
    $region12: #{tpu_custom_call.1} parent=1 // pred_region
      %s36 = ssub.s32 18432, 18432
      %37 = vsyncadd [#allocation6], %s36
      %s38 = sshll.u32 [#allocation7], 4
      %s39 = int_to_ptr.vmem [resolvable:$true] %s38
      %44 = dma.hbm_to_vmem [thread:$0]  %s2, 18432, %s39, [#allocation6], 128, 128, 8
    $region13: #{tpu_custom_call.1} parent=1 // pred_fallthru
      _
    // Predicated region
    $region14: #{tpu_custom_call.1} parent=1 // pred_check
      _
    $region15: #{tpu_custom_call.1} parent=1 // pred_check_branch
      %46 = sbr.rel (0) target = $region17
    $region16: #{tpu_custom_call.1} parent=1 // pred_region
      %s48 = ssub.s32 288, 288
      %49 = vsyncadd [#allocation9], %s48
      %s50 = sshll.u32 [#allocation8], 4
      %s51 = int_to_ptr.vmem [resolvable:$true] %s50
      %56 = dma.hbm_to_vmem [thread:$0]  %s3, 288, %s51, [#allocation9], 32, 32, 2
    $region17: #{tpu_custom_call.1} parent=1 // pred_fallthru
      _
    // Predicated region
    $region18: #{tpu_custom_call.1} parent=1 // pred_check
      _
    $region19: #{tpu_custom_call.1} parent=1 // pred_check_branch
      %58 = sbr.rel (0) target = $region21
    $region20: #{tpu_custom_call.1} parent=1 // pred_region
      %59 = dma.done [#allocation3], 128
    $region21: #{tpu_custom_call.1} parent=1 // pred_fallthru
      _
    // Predicated region
    $region22: #{tpu_custom_call.1} parent=1 // pred_check
      _
    $region23: #{tpu_custom_call.1} parent=1 // pred_check_branch
      %61 = sbr.rel (0) target = $region25
    $region24: #{tpu_custom_call.1} parent=1 // pred_region
      %62 = dma.done [#allocation6], 128
    $region25: #{tpu_custom_call.1} parent=1 // pred_fallthru
      _
    // Predicated region
    $region26: #{tpu_custom_call.1} parent=1 // pred_check
      _
    $region27: #{tpu_custom_call.1} parent=1 // pred_check_branch
      %64 = sbr.rel (0) target = $region29
    $region28: #{tpu_custom_call.1} parent=1 // pred_region
      %65 = dma.done [#allocation6], 18432
    $region29: #{tpu_custom_call.1} parent=1 // pred_fallthru
      _
    // Predicated region
    $region30: #{tpu_custom_call.1} parent=1 // pred_check
      _
    $region31: #{tpu_custom_call.1} parent=1 // pred_check_branch
      %67 = sbr.rel (0) target = $region33
    $region32: #{tpu_custom_call.1} parent=1 // pred_region
      %68 = dma.done [#allocation9], 288
    $region33: #{tpu_custom_call.1} parent=1 // pred_fallthru
      _
    %v69 = vld [vmem:[#allocation2] sm:$0xff]
    %v70 = vld [vmem:[#allocation5] sm:$0xff]
    %v71 = vmul.f32 %v69, %v70
    %72 = vst [vmem:[#allocation10] sm:$0xff] %v71
    %v73 = vld [vmem:[#allocation7] sm:$0xff]
    %v74 = vld [vmem:[#allocation7 + $0x8] sm:$0xff]
    %v75 = vld [vmem:[#allocation7 + $0x10] sm:$0xff]
    %v76 = vld [vmem:[#allocation7 + $0x18] sm:$0xff]
    %v77 = vld [vmem:[#allocation7 + $0x20] sm:$0xff]
    %v78 = vld [vmem:[#allocation7 + $0x28] sm:$0xff]
    %v79 = vld [vmem:[#allocation7 + $0x30] sm:$0xff]
    %v80 = vld [vmem:[#allocation7 + $0x38] sm:$0xff]
    %v81 = vld [vmem:[#allocation7 + $0x40] sm:$0xff]
    %v82 = vld [vmem:[#allocation7 + $0x48] sm:$0xff]
    %v83 = vld [vmem:[#allocation7 + $0x50] sm:$0xff]
    %v84 = vld [vmem:[#allocation7 + $0x58] sm:$0xff]
    %v85 = vld [vmem:[#allocation7 + $0x60] sm:$0xff]
    %v86 = vld [vmem:[#allocation7 + $0x68] sm:$0xff]
    %v87 = vld [vmem:[#allocation7 + $0x70] sm:$0xff]
    %v88 = vld [vmem:[#allocation7 + $0x78] sm:$0xff]
    %89 = vmatprep.subr.mxu0 0.0
    %90 = vmatpush1.msra.mxu0 %v73
    %91 = vmatprep.subr.mxu0 0.0
    %92 = vmatpush1.msra.mxu0 %v74
    %93 = vmatprep.subr.mxu0 0.0
    %94 = vmatpush1.msra.mxu0 %v75
    %95 = vmatprep.subr.mxu0 0.0
    %96 = vmatpush1.msra.mxu0 %v76
    %97 = vmatprep.subr.mxu0 0.0
    %98 = vmatpush1.msra.mxu0 %v77
    %99 = vmatprep.subr.mxu0 0.0
    %100 = vmatpush1.msra.mxu0 %v78
    %101 = vmatprep.subr.mxu0 0.0
    %102 = vmatpush1.msra.mxu0 %v79
    %103 = vmatprep.subr.mxu0 0.0
    %104 = vmatpush1.msra.mxu0 %v80
    %105 = vmatprep.subr.mxu0 0.0
    %106 = vmatpush1.msra.mxu0 %v81
    %107 = vmatprep.subr.mxu0 0.0
    %108 = vmatpush1.msra.mxu0 %v82
    %109 = vmatprep.subr.mxu0 0.0
    %110 = vmatpush1.msra.mxu0 %v83
    %111 = vmatprep.subr.mxu0 0.0
    %112 = vmatpush1.msra.mxu0 %v84
    %113 = vmatprep.subr.mxu0 0.0
    %114 = vmatpush1.msra.mxu0 %v85
    %115 = vmatprep.subr.mxu0 0.0
    %116 = vmatpush1.msra.mxu0 %v86
    %117 = vmatprep.subr.mxu0 0.0
    %118 = vmatpush1.msra.mxu0 %v87
    %119 = vmatprep.subr.mxu0 0.0
    %120 = vmatpush1.msra.mxu0 %v88
    %121 = vmatprep.subr.mxu0 0.0
    %122 = vmatpush1.msra.mxu0 0.0
    %123 = vmatprep.subr.mxu0 0.0
    %124 = vmatpush1.msra.mxu0 0.0
    %125 = vmatprep.subr.mxu0 0.0
    %126 = vmatpush1.msra.mxu0 0.0
    %127 = vmatprep.subr.mxu0 0.0
    %128 = vmatpush1.msra.mxu0 0.0
    %129 = vmatprep.subr.mxu0 0.0
    %130 = vmatpush1.msra.mxu0 0.0
    %131 = vmatprep.subr.mxu0 0.0
    %132 = vmatpush1.msra.mxu0 0.0
    %133 = vmatprep.subr.mxu0 0.0
    %134 = vmatpush1.msra.mxu0 0.0
    %135 = vmatprep.subr.mxu0 0.0
    %136 = vmatpush1.msra.mxu0 0.0
    %137 = vmatprep.subr.mxu0 0.0
    %138 = vmatpush1.msra.mxu0 0.0
    %139 = vmatprep.subr.mxu0 0.0
    %140 = vmatpush1.msra.mxu0 0.0
    %141 = vmatprep.subr.mxu0 0.0
    %142 = vmatpush1.msra.mxu0 0.0
    %143 = vmatprep.subr.mxu0 0.0
    %144 = vmatpush1.msra.mxu0 0.0
    %145 = vmatprep.subr.mxu0 0.0
    %146 = vmatpush1.msra.mxu0 0.0
    %147 = vmatprep.subr.mxu0 0.0
    %148 = vmatpush1.msra.mxu0 0.0
    %149 = vmatprep.subr.mxu0 0.0
    %150 = vmatpush1.msra.mxu0 0.0
    %151 = vmatprep.subr.mxu0 0.0
    %152 = vmatpush1.msra.mxu0 0.0
    %153 = vmatprep.mubr.f32.mxu0 0.0
    %154 = vmatmul.mubr.f32.gmra.mrb[0].mxu0 %v71
    %v155 = vpop.f32.mrb[0].mxu0
    %v156 = vadd.f32 0.0, %v155
    %v157 = vpop.f32.mrb[0].mxu0
    %158 = vdwg.mxu0
    %v159 = vld [vmem:[#allocation8] sm:$0x3]
    %v160 = vrot.slane %v156, 4
    %v161 = vadd.f32 %v156, %v160
    %v162 = vrot.slane %v161, 2
    %v163 = vadd.f32 %v161, %v162
    %v164 = vrot.slane %v163, 1
    %v165 = vadd.f32 %v163, %v164
    %v166 = vrcp.pop 8.0
    %v167 = vmul.f32 %v165, %v166
    %v168 = vmul.f32 %v156, %v156
    %v169 = vrot.slane %v168, 4
    %v170 = vadd.f32 %v168, %v169
    %v171 = vrot.slane %v170, 2
    %v172 = vadd.f32 %v170, %v171
    %v173 = vrot.slane %v172, 1
    %v174 = vadd.f32 %v172, %v173
    %v175 = vmul.f32 %v174, %v166
    %v176 = vmul.f32 %v167, %v167
    %v177 = vsub.f32 %v175, %v176
    %v178 = vadd.f32 %v177, 1e-05
    %v179 = vrsqrt.pop %v178
    %v180 = vmul.f32 %v179, %v159
    %v181 = vsub.f32 %v156, %v167
    %v182 = vlaneseq
    %v183 = vshrl.u32 %v182, 7
    %v184 = vsub.s32 0, %v183
    %v185 = vrot.slane %v180, %v184
    %v186 = vmul.f32 %v181, %v185
    %v187 = vlaneseq
    %v188 = vshrl.u32 %v187, 7
    %v189 = vsub.s32 1, %v188
    %v190 = vrot.slane %v159, %v189
    %v191 = vadd.f32 %v186, %v190
    %v192 = vmax.f32 %v191, 0.0
    %s193 = scalar_lea.vmem [#allocation7], 128
    %v194 = vld [vmem:[%s193] sm:$0xff]
    %v195 = vld [vmem:[%s193 + $0x8] sm:$0xff]
    %v196 = vld [vmem:[%s193 + $0x10] sm:$0xff]
    %v197 = vld [vmem:[%s193 + $0x18] sm:$0xff]
    %v198 = vld [vmem:[%s193 + $0x20] sm:$0xff]
    %v199 = vld [vmem:[%s193 + $0x28] sm:$0xff]
    %v200 = vld [vmem:[%s193 + $0x30] sm:$0xff]
    %v201 = vld [vmem:[%s193 + $0x38] sm:$0xff]
    %v202 = vld [vmem:[%s193 + $0x40] sm:$0xff]
    %v203 = vld [vmem:[%s193 + $0x48] sm:$0xff]
    %v204 = vld [vmem:[%s193 + $0x50] sm:$0xff]
    %v205 = vld [vmem:[%s193 + $0x58] sm:$0xff]
    %v206 = vld [vmem:[%s193 + $0x60] sm:$0xff]
    %v207 = vld [vmem:[%s193 + $0x68] sm:$0xff]
    %v208 = vld [vmem:[%s193 + $0x70] sm:$0xff]
    %v209 = vld [vmem:[%s193 + $0x78] sm:$0xff]
    %210 = vmatprep.subr.mxu0 0.0
    %211 = vmatpush1.msra.mxu0 %v194
    %212 = vmatprep.subr.mxu0 0.0
    %213 = vmatpush1.msra.mxu0 %v195
    %214 = vmatprep.subr.mxu0 0.0
    %215 = vmatpush1.msra.mxu0 %v196
    %216 = vmatprep.subr.mxu0 0.0
    %217 = vmatpush1.msra.mxu0 %v197
    %218 = vmatprep.subr.mxu0 0.0
    %219 = vmatpush1.msra.mxu0 %v198
    %220 = vmatprep.subr.mxu0 0.0
    %221 = vmatpush1.msra.mxu0 %v199
    %222 = vmatprep.subr.mxu0 0.0
    %223 = vmatpush1.msra.mxu0 %v200
    %224 = vmatprep.subr.mxu0 0.0
    %225 = vmatpush1.msra.mxu0 %v201
    %226 = vmatprep.subr.mxu0 0.0
    %227 = vmatpush1.msra.mxu0 %v202
    %228 = vmatprep.subr.mxu0 0.0
    %229 = vmatpush1.msra.mxu0 %v203
    %230 = vmatprep.subr.mxu0 0.0
    %231 = vmatpush1.msra.mxu0 %v204
    %232 = vmatprep.subr.mxu0 0.0
    %233 = vmatpush1.msra.mxu0 %v205
    %234 = vmatprep.subr.mxu0 0.0
    %235 = vmatpush1.msra.mxu0 %v206
    %236 = vmatprep.subr.mxu0 0.0
    %237 = vmatpush1.msra.mxu0 %v207
    %238 = vmatprep.subr.mxu0 0.0
    %239 = vmatpush1.msra.mxu0 %v208
    %240 = vmatprep.subr.mxu0 0.0
    %241 = vmatpush1.msra.mxu0 %v209
    %242 = vmatprep.subr.mxu0 0.0
    %243 = vmatpush1.msra.mxu0 0.0
    %244 = vmatprep.subr.mxu0 0.0
    %245 = vmatpush1.msra.mxu0 0.0
    %246 = vmatprep.subr.mxu0 0.0
    %247 = vmatpush1.msra.mxu0 0.0
    %248 = vmatprep.subr.mxu0 0.0
    %249 = vmatpush1.msra.mxu0 0.0
    %250 = vmatprep.subr.mxu0 0.0
    %251 = vmatpush1.msra.mxu0 0.0
    %252 = vmatprep.subr.mxu0 0.0
    %253 = vmatpush1.msra.mxu0 0.0
    %254 = vmatprep.subr.mxu0 0.0
    %255 = vmatpush1.msra.mxu0 0.0
    %256 = vmatprep.subr.mxu0 0.0
    %257 = vmatpush1.msra.mxu0 0.0
    %258 = vmatprep.subr.mxu0 0.0
    %259 = vmatpush1.msra.mxu0 0.0
    %260 = vmatprep.subr.mxu0 0.0
    %261 = vmatpush1.msra.mxu0 0.0
    %262 = vmatprep.subr.mxu0 0.0
    %263 = vmatpush1.msra.mxu0 0.0
    %264 = vmatprep.subr.mxu0 0.0
    %265 = vmatpush1.msra.mxu0 0.0
    %266 = vmatprep.subr.mxu0 0.0
    %267 = vmatpush1.msra.mxu0 0.0
    %268 = vmatprep.subr.mxu0 0.0
    %269 = vmatpush1.msra.mxu0 0.0
    %270 = vmatprep.subr.mxu0 0.0
    %271 = vmatpush1.msra.mxu0 0.0
    %272 = vmatprep.subr.mxu0 0.0
    %273 = vmatpush1.msra.mxu0 0.0
    %274 = vmatprep.mubr.f32.mxu0 0.0
    %275 = vmatmul.mubr.f32.gmra.mrb[0].mxu0 %v192
    %v276 = vpop.f32.mrb[0].mxu0
    %v277 = vadd.f32 0.0, %v276
    %v278 = vpop.f32.mrb[0].mxu0
    %279 = vdwg.mxu0
    %s280 = scalar_lea.vmem [#allocation8], 2
    %v281 = vld [vmem:[%s280] sm:$0x3]
    %v282 = vrot.slane %v277, 4
    %v283 = vadd.f32 %v277, %v282
    %v284 = vrot.slane %v283, 2
    %v285 = vadd.f32 %v283, %v284
    %v286 = vrot.slane %v285, 1
    %v287 = vadd.f32 %v285, %v286
    %v288 = vmul.f32 %v287, %v166
    %v289 = vmul.f32 %v277, %v277
    %v290 = vrot.slane %v289, 4
    %v291 = vadd.f32 %v289, %v290
    %v292 = vrot.slane %v291, 2
    %v293 = vadd.f32 %v291, %v292
    %v294 = vrot.slane %v293, 1
    %v295 = vadd.f32 %v293, %v294
    %v296 = vmul.f32 %v295, %v166
    %v297 = vmul.f32 %v288, %v288
    %v298 = vsub.f32 %v296, %v297
    %v299 = vadd.f32 %v298, 1e-05
    %v300 = vrsqrt.pop %v299
    %v301 = vmul.f32 %v300, %v281
    %v302 = vsub.f32 %v277, %v288
    %v303 = vlaneseq
    %v304 = vshrl.u32 %v303, 7
    %v305 = vsub.s32 0, %v304
    %v306 = vrot.slane %v301, %v305
    %v307 = vmul.f32 %v302, %v306
    %v308 = vlaneseq
    %v309 = vshrl.u32 %v308, 7
    %v310 = vsub.s32 1, %v309
    %v311 = vrot.slane %v281, %v310
    %v312 = vadd.f32 %v307, %v311
    %v313 = vmax.f32 %v312, 0.0
    %s314 = scalar_lea.vmem [#allocation7], 256
    %v315 = vld [vmem:[%s314] sm:$0xff]
    %v316 = vld [vmem:[%s314 + $0x8] sm:$0xff]
    %v317 = vld [vmem:[%s314 + $0x10] sm:$0xff]
    %v318 = vld [vmem:[%s314 + $0x18] sm:$0xff]
    %v319 = vld [vmem:[%s314 + $0x20] sm:$0xff]
    %v320 = vld [vmem:[%s314 + $0x28] sm:$0xff]
    %v321 = vld [vmem:[%s314 + $0x30] sm:$0xff]
    %v322 = vld [vmem:[%s314 + $0x38] sm:$0xff]
    %v323 = vld [vmem:[%s314 + $0x40] sm:$0xff]
    %v324 = vld [vmem:[%s314 + $0x48] sm:$0xff]
    %v325 = vld [vmem:[%s314 + $0x50] sm:$0xff]
    %v326 = vld [vmem:[%s314 + $0x58] sm:$0xff]
    %v327 = vld [vmem:[%s314 + $0x60] sm:$0xff]
    %v328 = vld [vmem:[%s314 + $0x68] sm:$0xff]
    %v329 = vld [vmem:[%s314 + $0x70] sm:$0xff]
    %v330 = vld [vmem:[%s314 + $0x78] sm:$0xff]
    %s331 = scalar_lea.vmem [#allocation8], 4
    %v332 = vld [vmem:[%s331] sm:$0x3]
    %v333 = vlaneseq
    %v334 = vshrl.u32 %v333, 7
    %v335 = vsub.s32 0, %v334
    %v336 = vrot.slane %v332, %v335
    %337 = vmatprep.subr.mxu0 0.0
    %338 = vmatpush1.msra.mxu0 %v315
    %339 = vmatprep.subr.mxu0 0.0
    %340 = vmatpush1.msra.mxu0 %v316
    %341 = vmatprep.subr.mxu0 0.0
    %342 = vmatpush1.msra.mxu0 %v317
    %343 = vmatprep.subr.mxu0 0.0
    %344 = vmatpush1.msra.mxu0 %v318
    %345 = vmatprep.subr.mxu0 0.0
    %346 = vmatpush1.msra.mxu0 %v319
    %347 = vmatprep.subr.mxu0 0.0
    %348 = vmatpush1.msra.mxu0 %v320
    %349 = vmatprep.subr.mxu0 0.0
    %350 = vmatpush1.msra.mxu0 %v321
    %351 = vmatprep.subr.mxu0 0.0
    %352 = vmatpush1.msra.mxu0 %v322
    %353 = vmatprep.subr.mxu0 0.0
    %354 = vmatpush1.msra.mxu0 %v323
    %355 = vmatprep.subr.mxu0 0.0
    %356 = vmatpush1.msra.mxu0 %v324
    %357 = vmatprep.subr.mxu0 0.0
    %358 = vmatpush1.msra.mxu0 %v325
    %359 = vmatprep.subr.mxu0 0.0
    %360 = vmatpush1.msra.mxu0 %v326
    %361 = vmatprep.subr.mxu0 0.0
    %362 = vmatpush1.msra.mxu0 %v327
    %363 = vmatprep.subr.mxu0 0.0
    %364 = vmatpush1.msra.mxu0 %v328
    %365 = vmatprep.subr.mxu0 0.0
    %366 = vmatpush1.msra.mxu0 %v329
    %367 = vmatprep.subr.mxu0 0.0
    %368 = vmatpush1.msra.mxu0 %v330
    %369 = vmatprep.subr.mxu0 0.0
    %370 = vmatpush1.msra.mxu0 0.0
    %371 = vmatprep.subr.mxu0 0.0
    %372 = vmatpush1.msra.mxu0 0.0
    %373 = vmatprep.subr.mxu0 0.0
    %374 = vmatpush1.msra.mxu0 0.0
    %375 = vmatprep.subr.mxu0 0.0
    %376 = vmatpush1.msra.mxu0 0.0
    %377 = vmatprep.subr.mxu0 0.0
    %378 = vmatpush1.msra.mxu0 0.0
    %379 = vmatprep.subr.mxu0 0.0
    %380 = vmatpush1.msra.mxu0 0.0
    %381 = vmatprep.subr.mxu0 0.0
    %382 = vmatpush1.msra.mxu0 0.0
    %383 = vmatprep.subr.mxu0 0.0
    %384 = vmatpush1.msra.mxu0 0.0
    %385 = vmatprep.subr.mxu0 0.0
    %386 = vmatpush1.msra.mxu0 0.0
    %387 = vmatprep.subr.mxu0 0.0
    %388 = vmatpush1.msra.mxu0 0.0
    %389 = vmatprep.subr.mxu0 0.0
    %390 = vmatpush1.msra.mxu0 0.0
    %391 = vmatprep.subr.mxu0 0.0
    %392 = vmatpush1.msra.mxu0 0.0
    %393 = vmatprep.subr.mxu0 0.0
    %394 = vmatpush1.msra.mxu0 0.0
    %395 = vmatprep.subr.mxu0 0.0
    %396 = vmatpush1.msra.mxu0 0.0
    %397 = vmatprep.subr.mxu0 0.0
    %398 = vmatpush1.msra.mxu0 0.0
    %399 = vmatprep.subr.mxu0 0.0
    %400 = vmatpush1.msra.mxu0 0.0
    %401 = vmatprep.mubr.f32.mxu0 0.0
    %402 = vmatmul.mubr.f32.gmra.mrb[0].mxu0 %v313
    %v403 = vpop.f32.mrb[0].mxu0
    %v404 = vadd.f32 %v336, %v403
    %v405 = vpop.f32.mrb[0].mxu0
    %406 = vdwg.mxu0
    %407 = vst [vmem:[#allocation10 + $0x8] sm:$0xff] %v404
    %s408 = scalar_lea.vmem [#allocation7], 384
    %v409 = vld [vmem:[%s408] sm:$0xff]
    %v410 = vld [vmem:[%s408 + $0x8] sm:$0xff]
    %v411 = vld [vmem:[%s408 + $0x10] sm:$0xff]
    %v412 = vld [vmem:[%s408 + $0x18] sm:$0xff]
    %v413 = vld [vmem:[%s408 + $0x20] sm:$0xff]
    %v414 = vld [vmem:[%s408 + $0x28] sm:$0xff]
    %v415 = vld [vmem:[%s408 + $0x30] sm:$0xff]
    %v416 = vld [vmem:[%s408 + $0x38] sm:$0xff]
    %v417 = vld [vmem:[%s408 + $0x40] sm:$0xff]
    %v418 = vld [vmem:[%s408 + $0x48] sm:$0xff]
    %v419 = vld [vmem:[%s408 + $0x50] sm:$0xff]
    %v420 = vld [vmem:[%s408 + $0x58] sm:$0xff]
    %v421 = vld [vmem:[%s408 + $0x60] sm:$0xff]
    %v422 = vld [vmem:[%s408 + $0x68] sm:$0xff]
    %v423 = vld [vmem:[%s408 + $0x70] sm:$0xff]
    %v424 = vld [vmem:[%s408 + $0x78] sm:$0xff]
    %425 = vmatprep.subr.mxu0 0.0
    %426 = vmatpush1.msra.mxu0 %v409
    %427 = vmatprep.subr.mxu0 0.0
    %428 = vmatpush1.msra.mxu0 %v410
    %429 = vmatprep.subr.mxu0 0.0
    %430 = vmatpush1.msra.mxu0 %v411
    %431 = vmatprep.subr.mxu0 0.0
    %432 = vmatpush1.msra.mxu0 %v412
    %433 = vmatprep.subr.mxu0 0.0
    %434 = vmatpush1.msra.mxu0 %v413
    %435 = vmatprep.subr.mxu0 0.0
    %436 = vmatpush1.msra.mxu0 %v414
    %437 = vmatprep.subr.mxu0 0.0
    %438 = vmatpush1.msra.mxu0 %v415
    %439 = vmatprep.subr.mxu0 0.0
    %440 = vmatpush1.msra.mxu0 %v416
    %441 = vmatprep.subr.mxu0 0.0
    %442 = vmatpush1.msra.mxu0 %v417
    %443 = vmatprep.subr.mxu0 0.0
    %444 = vmatpush1.msra.mxu0 %v418
    %445 = vmatprep.subr.mxu0 0.0
    %446 = vmatpush1.msra.mxu0 %v419
    %447 = vmatprep.subr.mxu0 0.0
    %448 = vmatpush1.msra.mxu0 %v420
    %449 = vmatprep.subr.mxu0 0.0
    %450 = vmatpush1.msra.mxu0 %v421
    %451 = vmatprep.subr.mxu0 0.0
    %452 = vmatpush1.msra.mxu0 %v422
    %453 = vmatprep.subr.mxu0 0.0
    %454 = vmatpush1.msra.mxu0 %v423
    %455 = vmatprep.subr.mxu0 0.0
    %456 = vmatpush1.msra.mxu0 %v424
    %457 = vmatprep.subr.mxu0 0.0
    %458 = vmatpush1.msra.mxu0 0.0
    %459 = vmatprep.subr.mxu0 0.0
    %460 = vmatpush1.msra.mxu0 0.0
    %461 = vmatprep.subr.mxu0 0.0
    %462 = vmatpush1.msra.mxu0 0.0
    %463 = vmatprep.subr.mxu0 0.0
    %464 = vmatpush1.msra.mxu0 0.0
    %465 = vmatprep.subr.mxu0 0.0
    %466 = vmatpush1.msra.mxu0 0.0
    %467 = vmatprep.subr.mxu0 0.0
    %468 = vmatpush1.msra.mxu0 0.0
    %469 = vmatprep.subr.mxu0 0.0
    %470 = vmatpush1.msra.mxu0 0.0
    %471 = vmatprep.subr.mxu0 0.0
    %472 = vmatpush1.msra.mxu0 0.0
    %473 = vmatprep.subr.mxu0 0.0
    %474 = vmatpush1.msra.mxu0 0.0
    %475 = vmatprep.subr.mxu0 0.0
    %476 = vmatpush1.msra.mxu0 0.0
    %477 = vmatprep.subr.mxu0 0.0
    %478 = vmatpush1.msra.mxu0 0.0
    %479 = vmatprep.subr.mxu0 0.0
    %480 = vmatpush1.msra.mxu0 0.0
    %481 = vmatprep.subr.mxu0 0.0
    %482 = vmatpush1.msra.mxu0 0.0
    %483 = vmatprep.subr.mxu0 0.0
    %484 = vmatpush1.msra.mxu0 0.0
    %485 = vmatprep.subr.mxu0 0.0
    %486 = vmatpush1.msra.mxu0 0.0
    %487 = vmatprep.subr.mxu0 0.0
    %488 = vmatpush1.msra.mxu0 0.0
    %489 = vmatprep.mubr.f32.mxu0 0.0
    %490 = vmatmul.mubr.f32.gmra.mrb[0].mxu0 %v404
    %v491 = vpop.f32.mrb[0].mxu0
    %v492 = vadd.f32 0.0, %v491
    %v493 = vpop.f32.mrb[0].mxu0
    %494 = vdwg.mxu0
    %s495 = scalar_lea.vmem [#allocation8], 6
    %v496 = vld [vmem:[%s495] sm:$0x3]
    %v497 = vrot.slane %v492, 4
    %v498 = vadd.f32 %v492, %v497
    %v499 = vrot.slane %v498, 2
    %v500 = vadd.f32 %v498, %v499
    %v501 = vrot.slane %v500, 1
    %v502 = vadd.f32 %v500, %v501
    %v503 = vmul.f32 %v502, %v166
    %v504 = vmul.f32 %v492, %v492
    %v505 = vrot.slane %v504, 4
    %v506 = vadd.f32 %v504, %v505
    %v507 = vrot.slane %v506, 2
    %v508 = vadd.f32 %v506, %v507
    %v509 = vrot.slane %v508, 1
    %v510 = vadd.f32 %v508, %v509
    %v511 = vmul.f32 %v510, %v166
    %v512 = vmul.f32 %v503, %v503
    %v513 = vsub.f32 %v511, %v512
    %v514 = vadd.f32 %v513, 1e-05
    %v515 = vrsqrt.pop %v514
    %v516 = vmul.f32 %v515, %v496
    %v517 = vsub.f32 %v492, %v503
    %v518 = vlaneseq
    %v519 = vshrl.u32 %v518, 7
    %v520 = vsub.s32 0, %v519
    %v521 = vrot.slane %v516, %v520
    %v522 = vmul.f32 %v517, %v521
    %v523 = vlaneseq
    %v524 = vshrl.u32 %v523, 7
    %v525 = vsub.s32 1, %v524
    %v526 = vrot.slane %v496, %v525
    %v527 = vadd.f32 %v522, %v526
    %v528 = vmax.f32 %v527, 0.0
    %529 = vst [vmem:[#allocation10 + $0x10] sm:$0xff] %v528
    %s530 = scalar_lea.vmem [#allocation7], 512
    %v531 = vld [vmem:[%s530] sm:$0xff]
    %v532 = vld [vmem:[%s530 + $0x8] sm:$0xff]
    %v533 = vld [vmem:[%s530 + $0x10] sm:$0xff]
    %v534 = vld [vmem:[%s530 + $0x18] sm:$0xff]
    %v535 = vld [vmem:[%s530 + $0x20] sm:$0xff]
    %v536 = vld [vmem:[%s530 + $0x28] sm:$0xff]
    %v537 = vld [vmem:[%s530 + $0x30] sm:$0xff]
    %v538 = vld [vmem:[%s530 + $0x38] sm:$0xff]
    %v539 = vld [vmem:[%s530 + $0x40] sm:$0xff]
    %v540 = vld [vmem:[%s530 + $0x48] sm:$0xff]
    %v541 = vld [vmem:[%s530 + $0x50] sm:$0xff]
    %v542 = vld [vmem:[%s530 + $0x58] sm:$0xff]
    %v543 = vld [vmem:[%s530 + $0x60] sm:$0xff]
    %v544 = vld [vmem:[%s530 + $0x68] sm:$0xff]
    %v545 = vld [vmem:[%s530 + $0x70] sm:$0xff]
    %v546 = vld [vmem:[%s530 + $0x78] sm:$0xff]
    %547 = vmatprep.subr.mxu0 0.0
    %548 = vmatpush1.msra.mxu0 %v531
    %549 = vmatprep.subr.mxu0 0.0
    %550 = vmatpush1.msra.mxu0 %v532
    %551 = vmatprep.subr.mxu0 0.0
    %552 = vmatpush1.msra.mxu0 %v533
    %553 = vmatprep.subr.mxu0 0.0
    %554 = vmatpush1.msra.mxu0 %v534
    %555 = vmatprep.subr.mxu0 0.0
    %556 = vmatpush1.msra.mxu0 %v535
    %557 = vmatprep.subr.mxu0 0.0
    %558 = vmatpush1.msra.mxu0 %v536
    %559 = vmatprep.subr.mxu0 0.0
    %560 = vmatpush1.msra.mxu0 %v537
    %561 = vmatprep.subr.mxu0 0.0
    %562 = vmatpush1.msra.mxu0 %v538
    %563 = vmatprep.subr.mxu0 0.0
    %564 = vmatpush1.msra.mxu0 %v539
    %565 = vmatprep.subr.mxu0 0.0
    %566 = vmatpush1.msra.mxu0 %v540
    %567 = vmatprep.subr.mxu0 0.0
    %568 = vmatpush1.msra.mxu0 %v541
    %569 = vmatprep.subr.mxu0 0.0
    %570 = vmatpush1.msra.mxu0 %v542
    %571 = vmatprep.subr.mxu0 0.0
    %572 = vmatpush1.msra.mxu0 %v543
    %573 = vmatprep.subr.mxu0 0.0
    %574 = vmatpush1.msra.mxu0 %v544
    %575 = vmatprep.subr.mxu0 0.0
    %576 = vmatpush1.msra.mxu0 %v545
    %577 = vmatprep.subr.mxu0 0.0
    %578 = vmatpush1.msra.mxu0 %v546
    %579 = vmatprep.subr.mxu0 0.0
    %580 = vmatpush1.msra.mxu0 0.0
    %581 = vmatprep.subr.mxu0 0.0
    %582 = vmatpush1.msra.mxu0 0.0
    %583 = vmatprep.subr.mxu0 0.0
    %584 = vmatpush1.msra.mxu0 0.0
    %585 = vmatprep.subr.mxu0 0.0
    %586 = vmatpush1.msra.mxu0 0.0
    %587 = vmatprep.subr.mxu0 0.0
    %588 = vmatpush1.msra.mxu0 0.0
    %589 = vmatprep.subr.mxu0 0.0
    %590 = vmatpush1.msra.mxu0 0.0
    %591 = vmatprep.subr.mxu0 0.0
    %592 = vmatpush1.msra.mxu0 0.0
    %593 = vmatprep.subr.mxu0 0.0
    %594 = vmatpush1.msra.mxu0 0.0
    %595 = vmatprep.subr.mxu0 0.0
    %596 = vmatpush1.msra.mxu0 0.0
    %597 = vmatprep.subr.mxu0 0.0
    %598 = vmatpush1.msra.mxu0 0.0
    %599 = vmatprep.subr.mxu0 0.0
    %600 = vmatpush1.msra.mxu0 0.0
    %601 = vmatprep.subr.mxu0 0.0
    %602 = vmatpush1.msra.mxu0 0.0
    %603 = vmatprep.subr.mxu0 0.0
    %604 = vmatpush1.msra.mxu0 0.0
    %605 = vmatprep.subr.mxu0 0.0
    %606 = vmatpush1.msra.mxu0 0.0
    %607 = vmatprep.subr.mxu0 0.0
    %608 = vmatpush1.msra.mxu0 0.0
    %609 = vmatprep.subr.mxu0 0.0
    %610 = vmatpush1.msra.mxu0 0.0
    %611 = vmatprep.mubr.f32.mxu0 0.0
    %612 = vmatmul.mubr.f32.gmra.mrb[0].mxu0 %v528
    %v613 = vpop.f32.mrb[0].mxu0
    %v614 = vadd.f32 0.0, %v613
    %v615 = vpop.f32.mrb[0].mxu0
    %616 = vdwg.mxu0
    %s617 = scalar_lea.vmem [#allocation8], 8
    %v618 = vld [vmem:[%s617] sm:$0x3]
    %v619 = vrot.slane %v614, 4
    %v620 = vadd.f32 %v614, %v619
    %v621 = vrot.slane %v620, 2
    %v622 = vadd.f32 %v620, %v621
    %v623 = vrot.slane %v622, 1
    %v624 = vadd.f32 %v622, %v623
    %v625 = vmul.f32 %v624, %v166
    %v626 = vmul.f32 %v614, %v614
    %v627 = vrot.slane %v626, 4
    %v628 = vadd.f32 %v626, %v627
    %v629 = vrot.slane %v628, 2
    %v630 = vadd.f32 %v628, %v629
    %v631 = vrot.slane %v630, 1
    %v632 = vadd.f32 %v630, %v631
    %v633 = vmul.f32 %v632, %v166
    %v634 = vmul.f32 %v625, %v625
    %v635 = vsub.f32 %v633, %v634
    %v636 = vadd.f32 %v635, 1e-05
    %v637 = vrsqrt.pop %v636
    %v638 = vmul.f32 %v637, %v618
    %v639 = vsub.f32 %v614, %v625
    %v640 = vlaneseq
    %v641 = vshrl.u32 %v640, 7
    %v642 = vsub.s32 0, %v641
    %v643 = vrot.slane %v638, %v642
    %v644 = vmul.f32 %v639, %v643
    %v645 = vlaneseq
    %v646 = vshrl.u32 %v645, 7
    %v647 = vsub.s32 1, %v646
    %v648 = vrot.slane %v618, %v647
    %v649 = vadd.f32 %v644, %v648
    %v650 = vmax.f32 %v649, 0.0
    %s651 = scalar_lea.vmem [#allocation7], 640
    %v652 = vld [vmem:[%s651] sm:$0xff]
    %v653 = vld [vmem:[%s651 + $0x8] sm:$0xff]
    %v654 = vld [vmem:[%s651 + $0x10] sm:$0xff]
    %v655 = vld [vmem:[%s651 + $0x18] sm:$0xff]
    %v656 = vld [vmem:[%s651 + $0x20] sm:$0xff]
    %v657 = vld [vmem:[%s651 + $0x28] sm:$0xff]
    %v658 = vld [vmem:[%s651 + $0x30] sm:$0xff]
    %v659 = vld [vmem:[%s651 + $0x38] sm:$0xff]
    %v660 = vld [vmem:[%s651 + $0x40] sm:$0xff]
    %v661 = vld [vmem:[%s651 + $0x48] sm:$0xff]
    %v662 = vld [vmem:[%s651 + $0x50] sm:$0xff]
    %v663 = vld [vmem:[%s651 + $0x58] sm:$0xff]
    %v664 = vld [vmem:[%s651 + $0x60] sm:$0xff]
    %v665 = vld [vmem:[%s651 + $0x68] sm:$0xff]
    %v666 = vld [vmem:[%s651 + $0x70] sm:$0xff]
    %v667 = vld [vmem:[%s651 + $0x78] sm:$0xff]
    %s668 = scalar_lea.vmem [#allocation8], 10
    %v669 = vld [vmem:[%s668] sm:$0x3]
    %v670 = vlaneseq
    %v671 = vshrl.u32 %v670, 7
    %v672 = vsub.s32 0, %v671
    %v673 = vrot.slane %v669, %v672
    %674 = vmatprep.subr.mxu0 0.0
    %675 = vmatpush1.msra.mxu0 %v652
    %676 = vmatprep.subr.mxu0 0.0
    %677 = vmatpush1.msra.mxu0 %v653
    %678 = vmatprep.subr.mxu0 0.0
    %679 = vmatpush1.msra.mxu0 %v654
    %680 = vmatprep.subr.mxu0 0.0
    %681 = vmatpush1.msra.mxu0 %v655
    %682 = vmatprep.subr.mxu0 0.0
    %683 = vmatpush1.msra.mxu0 %v656
    %684 = vmatprep.subr.mxu0 0.0
    %685 = vmatpush1.msra.mxu0 %v657
    %686 = vmatprep.subr.mxu0 0.0
    %687 = vmatpush1.msra.mxu0 %v658
    %688 = vmatprep.subr.mxu0 0.0
    %689 = vmatpush1.msra.mxu0 %v659
    %690 = vmatprep.subr.mxu0 0.0
    %691 = vmatpush1.msra.mxu0 %v660
    %692 = vmatprep.subr.mxu0 0.0
    %693 = vmatpush1.msra.mxu0 %v661
    %694 = vmatprep.subr.mxu0 0.0
    %695 = vmatpush1.msra.mxu0 %v662
    %696 = vmatprep.subr.mxu0 0.0
    %697 = vmatpush1.msra.mxu0 %v663
    %698 = vmatprep.subr.mxu0 0.0
    %699 = vmatpush1.msra.mxu0 %v664
    %700 = vmatprep.subr.mxu0 0.0
    %701 = vmatpush1.msra.mxu0 %v665
    %702 = vmatprep.subr.mxu0 0.0
    %703 = vmatpush1.msra.mxu0 %v666
    %704 = vmatprep.subr.mxu0 0.0
    %705 = vmatpush1.msra.mxu0 %v667
    %706 = vmatprep.subr.mxu0 0.0
    %707 = vmatpush1.msra.mxu0 0.0
    %708 = vmatprep.subr.mxu0 0.0
    %709 = vmatpush1.msra.mxu0 0.0
    %710 = vmatprep.subr.mxu0 0.0
    %711 = vmatpush1.msra.mxu0 0.0
    %712 = vmatprep.subr.mxu0 0.0
    %713 = vmatpush1.msra.mxu0 0.0
    %714 = vmatprep.subr.mxu0 0.0
    %715 = vmatpush1.msra.mxu0 0.0
    %716 = vmatprep.subr.mxu0 0.0
    %717 = vmatpush1.msra.mxu0 0.0
    %718 = vmatprep.subr.mxu0 0.0
    %719 = vmatpush1.msra.mxu0 0.0
    %720 = vmatprep.subr.mxu0 0.0
    %721 = vmatpush1.msra.mxu0 0.0
    %722 = vmatprep.subr.mxu0 0.0
    %723 = vmatpush1.msra.mxu0 0.0
    %724 = vmatprep.subr.mxu0 0.0
    %725 = vmatpush1.msra.mxu0 0.0
    %726 = vmatprep.subr.mxu0 0.0
    %727 = vmatpush1.msra.mxu0 0.0
    %728 = vmatprep.subr.mxu0 0.0
    %729 = vmatpush1.msra.mxu0 0.0
    %730 = vmatprep.subr.mxu0 0.0
    %731 = vmatpush1.msra.mxu0 0.0
    %732 = vmatprep.subr.mxu0 0.0
    %733 = vmatpush1.msra.mxu0 0.0
    %734 = vmatprep.subr.mxu0 0.0
    %735 = vmatpush1.msra.mxu0 0.0
    %736 = vmatprep.subr.mxu0 0.0
    %737 = vmatpush1.msra.mxu0 0.0
    %738 = vmatprep.mubr.f32.mxu0 0.0
    %739 = vmatmul.mubr.f32.gmra.mrb[0].mxu0 %v650
    %v740 = vpop.f32.mrb[0].mxu0
    %v741 = vadd.f32 %v673, %v740
    %v742 = vpop.f32.mrb[0].mxu0
    %743 = vdwg.mxu0
    %744 = vst [vmem:[#allocation10 + $0x18] sm:$0xff] %v741
    %s745 = scalar_lea.vmem [#allocation7], 768
    %v746 = vld [vmem:[%s745] sm:$0xff]
    %v747 = vld [vmem:[%s745 + $0x8] sm:$0xff]
    %v748 = vld [vmem:[%s745 + $0x10] sm:$0xff]
    %v749 = vld [vmem:[%s745 + $0x18] sm:$0xff]
    %v750 = vld [vmem:[%s745 + $0x20] sm:$0xff]
    %v751 = vld [vmem:[%s745 + $0x28] sm:$0xff]
    %v752 = vld [vmem:[%s745 + $0x30] sm:$0xff]
    %v753 = vld [vmem:[%s745 + $0x38] sm:$0xff]
    %v754 = vld [vmem:[%s745 + $0x40] sm:$0xff]
    %v755 = vld [vmem:[%s745 + $0x48] sm:$0xff]
    %v756 = vld [vmem:[%s745 + $0x50] sm:$0xff]
    %v757 = vld [vmem:[%s745 + $0x58] sm:$0xff]
    %v758 = vld [vmem:[%s745 + $0x60] sm:$0xff]
    %v759 = vld [vmem:[%s745 + $0x68] sm:$0xff]
    %v760 = vld [vmem:[%s745 + $0x70] sm:$0xff]
    %v761 = vld [vmem:[%s745 + $0x78] sm:$0xff]
    %762 = vmatprep.subr.mxu0 0.0
    %763 = vmatpush1.msra.mxu0 %v746
    %764 = vmatprep.subr.mxu0 0.0
    %765 = vmatpush1.msra.mxu0 %v747
    %766 = vmatprep.subr.mxu0 0.0
    %767 = vmatpush1.msra.mxu0 %v748
    %768 = vmatprep.subr.mxu0 0.0
    %769 = vmatpush1.msra.mxu0 %v749
    %770 = vmatprep.subr.mxu0 0.0
    %771 = vmatpush1.msra.mxu0 %v750
    %772 = vmatprep.subr.mxu0 0.0
    %773 = vmatpush1.msra.mxu0 %v751
    %774 = vmatprep.subr.mxu0 0.0
    %775 = vmatpush1.msra.mxu0 %v752
    %776 = vmatprep.subr.mxu0 0.0
    %777 = vmatpush1.msra.mxu0 %v753
    %778 = vmatprep.subr.mxu0 0.0
    %779 = vmatpush1.msra.mxu0 %v754
    %780 = vmatprep.subr.mxu0 0.0
    %781 = vmatpush1.msra.mxu0 %v755
    %782 = vmatprep.subr.mxu0 0.0
    %783 = vmatpush1.msra.mxu0 %v756
    %784 = vmatprep.subr.mxu0 0.0
    %785 = vmatpush1.msra.mxu0 %v757
    %786 = vmatprep.subr.mxu0 0.0
    %787 = vmatpush1.msra.mxu0 %v758
    %788 = vmatprep.subr.mxu0 0.0
    %789 = vmatpush1.msra.mxu0 %v759
    %790 = vmatprep.subr.mxu0 0.0
    %791 = vmatpush1.msra.mxu0 %v760
    %792 = vmatprep.subr.mxu0 0.0
    %793 = vmatpush1.msra.mxu0 %v761
    %794 = vmatprep.subr.mxu0 0.0
    %795 = vmatpush1.msra.mxu0 0.0
    %796 = vmatprep.subr.mxu0 0.0
    %797 = vmatpush1.msra.mxu0 0.0
    %798 = vmatprep.subr.mxu0 0.0
    %799 = vmatpush1.msra.mxu0 0.0
    %800 = vmatprep.subr.mxu0 0.0
    %801 = vmatpush1.msra.mxu0 0.0
    %802 = vmatprep.subr.mxu0 0.0
    %803 = vmatpush1.msra.mxu0 0.0
    %804 = vmatprep.subr.mxu0 0.0
    %805 = vmatpush1.msra.mxu0 0.0
    %806 = vmatprep.subr.mxu0 0.0
    %807 = vmatpush1.msra.mxu0 0.0
    %808 = vmatprep.subr.mxu0 0.0
    %809 = vmatpush1.msra.mxu0 0.0
    %810 = vmatprep.subr.mxu0 0.0
    %811 = vmatpush1.msra.mxu0 0.0
    %812 = vmatprep.subr.mxu0 0.0
    %813 = vmatpush1.msra.mxu0 0.0
    %814 = vmatprep.subr.mxu0 0.0
    %815 = vmatpush1.msra.mxu0 0.0
    %816 = vmatprep.subr.mxu0 0.0
    %817 = vmatpush1.msra.mxu0 0.0
    %818 = vmatprep.subr.mxu0 0.0
    %819 = vmatpush1.msra.mxu0 0.0
    %820 = vmatprep.subr.mxu0 0.0
    %821 = vmatpush1.msra.mxu0 0.0
    %822 = vmatprep.subr.mxu0 0.0
    %823 = vmatpush1.msra.mxu0 0.0
    %824 = vmatprep.subr.mxu0 0.0
    %825 = vmatpush1.msra.mxu0 0.0
    %826 = vmatprep.mubr.f32.mxu0 0.0
    %827 = vmatmul.mubr.f32.gmra.mrb[0].mxu0 %v404
    %v828 = vpop.f32.mrb[0].mxu0
    %v829 = vadd.f32 0.0, %v828
    %v830 = vpop.f32.mrb[0].mxu0
    %831 = vdwg.mxu0
    %s832 = scalar_lea.vmem [#allocation8], 12
    %v833 = vld [vmem:[%s832] sm:$0x3]
    %v834 = vrot.slane %v829, 4
    %v835 = vadd.f32 %v829, %v834
    %v836 = vrot.slane %v835, 2
    %v837 = vadd.f32 %v835, %v836
    %v838 = vrot.slane %v837, 1
    %v839 = vadd.f32 %v837, %v838
    %v840 = vmul.f32 %v839, %v166
    %v841 = vmul.f32 %v829, %v829
    %v842 = vrot.slane %v841, 4
    %v843 = vadd.f32 %v841, %v842
    %v844 = vrot.slane %v843, 2
    %v845 = vadd.f32 %v843, %v844
    %v846 = vrot.slane %v845, 1
    %v847 = vadd.f32 %v845, %v846
    %v848 = vmul.f32 %v847, %v166
    %v849 = vmul.f32 %v840, %v840
    %v850 = vsub.f32 %v848, %v849
    %v851 = vadd.f32 %v850, 1e-05
    %v852 = vrsqrt.pop %v851
    %v853 = vmul.f32 %v852, %v833
    %v854 = vsub.f32 %v829, %v840
    %v855 = vlaneseq
    %v856 = vshrl.u32 %v855, 7
    %v857 = vsub.s32 0, %v856
    %v858 = vrot.slane %v853, %v857
    %v859 = vmul.f32 %v854, %v858
    %v860 = vlaneseq
    %v861 = vshrl.u32 %v860, 7
    %v862 = vsub.s32 1, %v861
    %v863 = vrot.slane %v833, %v862
    %v864 = vadd.f32 %v859, %v863
    %v865 = vmax.f32 %v864, 0.0
    %s866 = scalar_lea.vmem [#allocation7], 896
    %v867 = vld [vmem:[%s866] sm:$0xff]
    %v868 = vld [vmem:[%s866 + $0x8] sm:$0xff]
    %v869 = vld [vmem:[%s866 + $0x10] sm:$0xff]
    %v870 = vld [vmem:[%s866 + $0x18] sm:$0xff]
    %v871 = vld [vmem:[%s866 + $0x20] sm:$0xff]
    %v872 = vld [vmem:[%s866 + $0x28] sm:$0xff]
    %v873 = vld [vmem:[%s866 + $0x30] sm:$0xff]
    %v874 = vld [vmem:[%s866 + $0x38] sm:$0xff]
    %v875 = vld [vmem:[%s866 + $0x40] sm:$0xff]
    %v876 = vld [vmem:[%s866 + $0x48] sm:$0xff]
    %v877 = vld [vmem:[%s866 + $0x50] sm:$0xff]
    %v878 = vld [vmem:[%s866 + $0x58] sm:$0xff]
    %v879 = vld [vmem:[%s866 + $0x60] sm:$0xff]
    %v880 = vld [vmem:[%s866 + $0x68] sm:$0xff]
    %v881 = vld [vmem:[%s866 + $0x70] sm:$0xff]
    %v882 = vld [vmem:[%s866 + $0x78] sm:$0xff]
    %883 = vmatprep.subr.mxu0 0.0
    %884 = vmatpush1.msra.mxu0 %v867
    %885 = vmatprep.subr.mxu0 0.0
    %886 = vmatpush1.msra.mxu0 %v868
    %887 = vmatprep.subr.mxu0 0.0
    %888 = vmatpush1.msra.mxu0 %v869
    %889 = vmatprep.subr.mxu0 0.0
    %890 = vmatpush1.msra.mxu0 %v870
    %891 = vmatprep.subr.mxu0 0.0
    %892 = vmatpush1.msra.mxu0 %v871
    %893 = vmatprep.subr.mxu0 0.0
    %894 = vmatpush1.msra.mxu0 %v872
    %895 = vmatprep.subr.mxu0 0.0
    %896 = vmatpush1.msra.mxu0 %v873
    %897 = vmatprep.subr.mxu0 0.0
    %898 = vmatpush1.msra.mxu0 %v874
    %899 = vmatprep.subr.mxu0 0.0
    %900 = vmatpush1.msra.mxu0 %v875
    %901 = vmatprep.subr.mxu0 0.0
    %902 = vmatpush1.msra.mxu0 %v876
    %903 = vmatprep.subr.mxu0 0.0
    %904 = vmatpush1.msra.mxu0 %v877
    %905 = vmatprep.subr.mxu0 0.0
    %906 = vmatpush1.msra.mxu0 %v878
    %907 = vmatprep.subr.mxu0 0.0
    %908 = vmatpush1.msra.mxu0 %v879
    %909 = vmatprep.subr.mxu0 0.0
    %910 = vmatpush1.msra.mxu0 %v880
    %911 = vmatprep.subr.mxu0 0.0
    %912 = vmatpush1.msra.mxu0 %v881
    %913 = vmatprep.subr.mxu0 0.0
    %914 = vmatpush1.msra.mxu0 %v882
    %915 = vmatprep.subr.mxu0 0.0
    %916 = vmatpush1.msra.mxu0 0.0
    %917 = vmatprep.subr.mxu0 0.0
    %918 = vmatpush1.msra.mxu0 0.0
    %919 = vmatprep.subr.mxu0 0.0
    %920 = vmatpush1.msra.mxu0 0.0
    %921 = vmatprep.subr.mxu0 0.0
    %922 = vmatpush1.msra.mxu0 0.0
    %923 = vmatprep.subr.mxu0 0.0
    %924 = vmatpush1.msra.mxu0 0.0
    %925 = vmatprep.subr.mxu0 0.0
    %926 = vmatpush1.msra.mxu0 0.0
    %927 = vmatprep.subr.mxu0 0.0
    %928 = vmatpush1.msra.mxu0 0.0
    %929 = vmatprep.subr.mxu0 0.0
    %930 = vmatpush1.msra.mxu0 0.0
    %931 = vmatprep.subr.mxu0 0.0
    %932 = vmatpush1.msra.mxu0 0.0
    %933 = vmatprep.subr.mxu0 0.0
    %934 = vmatpush1.msra.mxu0 0.0
    %935 = vmatprep.subr.mxu0 0.0
    %936 = vmatpush1.msra.mxu0 0.0
    %937 = vmatprep.subr.mxu0 0.0
    %938 = vmatpush1.msra.mxu0 0.0
    %939 = vmatprep.subr.mxu0 0.0
    %940 = vmatpush1.msra.mxu0 0.0
    %941 = vmatprep.subr.mxu0 0.0
    %942 = vmatpush1.msra.mxu0 0.0
    %943 = vmatprep.subr.mxu0 0.0
    %944 = vmatpush1.msra.mxu0 0.0
    %945 = vmatprep.subr.mxu0 0.0
    %946 = vmatpush1.msra.mxu0 0.0
    %947 = vmatprep.mubr.f32.mxu0 0.0
    %948 = vmatmul.mubr.f32.gmra.mrb[0].mxu0 %v865
    %v949 = vpop.f32.mrb[0].mxu0
    %v950 = vadd.f32 0.0, %v949
    %v951 = vpop.f32.mrb[0].mxu0
    %952 = vdwg.mxu0
    %s953 = scalar_lea.vmem [#allocation8], 14
    %v954 = vld [vmem:[%s953] sm:$0x3]
    %v955 = vrot.slane %v950, 4
    %v956 = vadd.f32 %v950, %v955
    %v957 = vrot.slane %v956, 2
    %v958 = vadd.f32 %v956, %v957
    %v959 = vrot.slane %v958, 1
    %v960 = vadd.f32 %v958, %v959
    %v961 = vmul.f32 %v960, %v166
    %v962 = vmul.f32 %v950, %v950
    %v963 = vrot.slane %v962, 4
    %v964 = vadd.f32 %v962, %v963
    %v965 = vrot.slane %v964, 2
    %v966 = vadd.f32 %v964, %v965
    %v967 = vrot.slane %v966, 1
    %v968 = vadd.f32 %v966, %v967
    %v969 = vmul.f32 %v968, %v166
    %v970 = vmul.f32 %v961, %v961
    %v971 = vsub.f32 %v969, %v970
    %v972 = vadd.f32 %v971, 1e-05
    %v973 = vrsqrt.pop %v972
    %v974 = vmul.f32 %v973, %v954
    %v975 = vsub.f32 %v950, %v961
    %v976 = vlaneseq
    %v977 = vshrl.u32 %v976, 7
    %v978 = vsub.s32 0, %v977
    %v979 = vrot.slane %v974, %v978
    %v980 = vmul.f32 %v975, %v979
    %v981 = vlaneseq
    %v982 = vshrl.u32 %v981, 7
    %v983 = vsub.s32 1, %v982
    %v984 = vrot.slane %v954, %v983
    %v985 = vadd.f32 %v980, %v984
    %v986 = vmax.f32 %v985, 0.0
    %s987 = scalar_lea.vmem [#allocation7], 1024
    %v988 = vld [vmem:[%s987] sm:$0xff]
    %v989 = vld [vmem:[%s987 + $0x8] sm:$0xff]
    %v990 = vld [vmem:[%s987 + $0x10] sm:$0xff]
    %v991 = vld [vmem:[%s987 + $0x18] sm:$0xff]
    %v992 = vld [vmem:[%s987 + $0x20] sm:$0xff]
    %v993 = vld [vmem:[%s987 + $0x28] sm:$0xff]
    %v994 = vld [vmem:[%s987 + $0x30] sm:$0xff]
    %v995 = vld [vmem:[%s987 + $0x38] sm:$0xff]
    %v996 = vld [vmem:[%s987 + $0x40] sm:$0xff]
    %v997 = vld [vmem:[%s987 + $0x48] sm:$0xff]
    %v998 = vld [vmem:[%s987 + $0x50] sm:$0xff]
    %v999 = vld [vmem:[%s987 + $0x58] sm:$0xff]
    %v1000 = vld [vmem:[%s987 + $0x60] sm:$0xff]
    %v1001 = vld [vmem:[%s987 + $0x68] sm:$0xff]
    %v1002 = vld [vmem:[%s987 + $0x70] sm:$0xff]
    %v1003 = vld [vmem:[%s987 + $0x78] sm:$0xff]
    %s1004 = scalar_lea.vmem [#allocation8], 16
    %v1005 = vld [vmem:[%s1004] sm:$0x3]
    %v1006 = vlaneseq
    %v1007 = vshrl.u32 %v1006, 7
    %v1008 = vsub.s32 0, %v1007
    %v1009 = vrot.slane %v1005, %v1008
    %1010 = vmatprep.subr.mxu0 0.0
    %1011 = vmatpush1.msra.mxu0 %v988
    %1012 = vmatprep.subr.mxu0 0.0
    %1013 = vmatpush1.msra.mxu0 %v989
    %1014 = vmatprep.subr.mxu0 0.0
    %1015 = vmatpush1.msra.mxu0 %v990
    %1016 = vmatprep.subr.mxu0 0.0
    %1017 = vmatpush1.msra.mxu0 %v991
    %1018 = vmatprep.subr.mxu0 0.0
    %1019 = vmatpush1.msra.mxu0 %v992
    %1020 = vmatprep.subr.mxu0 0.0
    %1021 = vmatpush1.msra.mxu0 %v993
    %1022 = vmatprep.subr.mxu0 0.0
    %1023 = vmatpush1.msra.mxu0 %v994
    %1024 = vmatprep.subr.mxu0 0.0
    %1025 = vmatpush1.msra.mxu0 %v995
    %1026 = vmatprep.subr.mxu0 0.0
    %1027 = vmatpush1.msra.mxu0 %v996
    %1028 = vmatprep.subr.mxu0 0.0
    %1029 = vmatpush1.msra.mxu0 %v997
    %1030 = vmatprep.subr.mxu0 0.0
    %1031 = vmatpush1.msra.mxu0 %v998
    %1032 = vmatprep.subr.mxu0 0.0
    %1033 = vmatpush1.msra.mxu0 %v999
    %1034 = vmatprep.subr.mxu0 0.0
    %1035 = vmatpush1.msra.mxu0 %v1000
    %1036 = vmatprep.subr.mxu0 0.0
    %1037 = vmatpush1.msra.mxu0 %v1001
    %1038 = vmatprep.subr.mxu0 0.0
    %1039 = vmatpush1.msra.mxu0 %v1002
    %1040 = vmatprep.subr.mxu0 0.0
    %1041 = vmatpush1.msra.mxu0 %v1003
    %1042 = vmatprep.subr.mxu0 0.0
    %1043 = vmatpush1.msra.mxu0 0.0
    %1044 = vmatprep.subr.mxu0 0.0
    %1045 = vmatpush1.msra.mxu0 0.0
    %1046 = vmatprep.subr.mxu0 0.0
    %1047 = vmatpush1.msra.mxu0 0.0
    %1048 = vmatprep.subr.mxu0 0.0
    %1049 = vmatpush1.msra.mxu0 0.0
    %1050 = vmatprep.subr.mxu0 0.0
    %1051 = vmatpush1.msra.mxu0 0.0
    %1052 = vmatprep.subr.mxu0 0.0
    %1053 = vmatpush1.msra.mxu0 0.0
    %1054 = vmatprep.subr.mxu0 0.0
    %1055 = vmatpush1.msra.mxu0 0.0
    %1056 = vmatprep.subr.mxu0 0.0
    %1057 = vmatpush1.msra.mxu0 0.0
    %1058 = vmatprep.subr.mxu0 0.0
    %1059 = vmatpush1.msra.mxu0 0.0
    %1060 = vmatprep.subr.mxu0 0.0
    %1061 = vmatpush1.msra.mxu0 0.0
    %1062 = vmatprep.subr.mxu0 0.0
    %1063 = vmatpush1.msra.mxu0 0.0
    %1064 = vmatprep.subr.mxu0 0.0
    %1065 = vmatpush1.msra.mxu0 0.0
    %1066 = vmatprep.subr.mxu0 0.0
    %1067 = vmatpush1.msra.mxu0 0.0
    %1068 = vmatprep.subr.mxu0 0.0
    %1069 = vmatpush1.msra.mxu0 0.0
    %1070 = vmatprep.subr.mxu0 0.0
    %1071 = vmatpush1.msra.mxu0 0.0
    %1072 = vmatprep.subr.mxu0 0.0
    %1073 = vmatpush1.msra.mxu0 0.0
    %1074 = vmatprep.mubr.f32.mxu0 0.0
    %1075 = vmatmul.mubr.f32.gmra.mrb[0].mxu0 %v986
    %v1076 = vpop.f32.mrb[0].mxu0
    %v1077 = vadd.f32 %v1009, %v1076
    %v1078 = vpop.f32.mrb[0].mxu0
    %1079 = vdwg.mxu0
    %1080 = vst [vmem:[#allocation10 + $0x20] sm:$0xff] %v1077
    // Predicated region
    $region34: #{tpu_custom_call.1} parent=1 // pred_check
      _
    $region35: #{tpu_custom_call.1} parent=1 // pred_check_branch
      %1082 = sbr.rel (0) target = $region37
    $region36: #{tpu_custom_call.1} parent=1 // pred_region
      %s1084 = ssub.s32 640, 640
      %1085 = vsyncadd [#allocation4], %s1084
      %s1087 = sshll.u32 [#allocation10], 4
      %s1088 = int_to_ptr.vmem [resolvable:$true] %s1087
      %1090 = dma.vmem_to_hbm [thread:$0]  %s1088, 640, %s4, [#allocation4]
    $region37: #{tpu_custom_call.1} parent=1 // pred_fallthru
      _
    // Predicated region
    $region38: #{tpu_custom_call.1} parent=1 // pred_check
      _
    $region39: #{tpu_custom_call.1} parent=1 // pred_check_branch
      %1092 = sbr.rel (0) target = $region41
    $region40: #{tpu_custom_call.1} parent=1 // pred_region
      %1093 = dma.done [#allocation4], 640
    $region41: #{tpu_custom_call.1} parent=1 // pred_fallthru
      _
    %1094 = vsyncpa [#allocation3], 1
    %1095 = vsyncpa [#allocation6], 1
    %1096 = vsyncpa [#allocation9], 1
    %1097 = vsyncpa [#allocation4], 1

</llo_original>
